<compile_context>
chip_gen: v7x
topology: tpu7x:2x2x1
jax: 0.10.0
libtpu: 0.0.40
codegen_flags: <defaults>
</compile_context>

<pallas_src>
import functools

import jax
import jax.numpy as jnp
from jax.experimental import pallas as pl
from jax.experimental.pallas import tpu as pltpu

_MAX_TILE_LANES = 4096                     # batch columns per grid step
_PREC = jax.lax.Precision.HIGHEST          # fp32 parity with the PyTorch module


def _make_kernel(h1, h2, h3, off1, off2, off3):
    """Kernel closure with layer widths / packed-bias offsets baked in statically."""

    def kernel(x_ref, w1_ref, w2_ref, w3_ref, b_ref, o_ref):
        x = x_ref[...]                               # (S, tb)   batch on lanes
        b = b_ref[...]                               # (pad, 1)  packed biases (column)
        b1 = b[off1:off1 + h1, :]                    # (h1, 1)
        b2 = b[off2:off2 + h2, :]                    # (h2, 1)
        b3 = b[off3:off3 + h3, :]                    # (h3, 1) == (1, 1)

        # fc1 + relu (MXU; output (h1, tb) lane-dense)
        a1 = jnp.dot(w1_ref[...], x,
                     preferred_element_type=jnp.float32, precision=_PREC)
        a1 = jnp.maximum(a1 + b1, 0.0)

        # fc2 + relu (MXU)
        a2 = jnp.dot(w2_ref[...], a1,
                     preferred_element_type=jnp.float32, precision=_PREC)
        a2 = jnp.maximum(a2 + b2, 0.0)

        # value head on the (idle) MXU -> lane-dense (1, tb) output, full-width vst
        v = jnp.dot(w3_ref[...], a2,
                    preferred_element_type=jnp.float32, precision=_PREC) + b3
        o_ref[...] = v.astype(o_ref.dtype)

    return kernel


def _round_up(n, m):
    return -(-n // m) * m


def pack_params(params):
    """One-time packing (call once at setup, not per forward):
    weights kept in PyTorch (out, in) orientation; biases packed into a single
    8-sublane-aligned column vector so the kernel needs one resident bias DMA."""
    w1 = jnp.asarray(params["w1"], jnp.float32)      # (H1, S)
    w2 = jnp.asarray(params["w2"], jnp.float32)      # (H2, H1)
    w3 = jnp.asarray(params["w3"], jnp.float32)      # (H3, H2), H3 == 1
    h1, h2, h3 = w1.shape[0], w2.shape[0], w3.shape[0]
    off1 = 0
    off2 = _round_up(h1, 8)
    off3 = off2 + _round_up(h2, 8)
    nrows = _round_up(off3 + h3, 8)
    b = jnp.zeros((nrows, 1), jnp.float32)
    b = b.at[off1:off1 + h1, 0].set(jnp.asarray(params["b1"], jnp.float32).reshape(-1))
    b = b.at[off2:off2 + h2, 0].set(jnp.asarray(params["b2"], jnp.float32).reshape(-1))
    b = b.at[off3:off3 + h3, 0].set(jnp.asarray(params["b3"], jnp.float32).reshape(-1))
    return {"w1": w1, "w2": w2, "w3": w3, "b": b,
            "dims": (h1, h2, h3), "offsets": (off1, off2, off3)}


def _pick_tile(B, max_tile):
    """Lane-axis batch tile: multiple of 128 unless it covers the full batch;
    guarantees >= 2 grid steps once B >= 256 so both v7x TensorCores get work."""
    max_tile = max(128, (max_tile // 128) * 128)
    tb = min(max_tile, B)
    if B >= 256:
        half = _round_up(pl.cdiv(B, 2), 128)
        tb = min(tb, half)
    if tb < B:
        tb = max(128, (tb // 128) * 128)
    return tb


def critic_forward(state, packed, tile_lanes=None):
    """state: (B, num_state) f32.  packed: output of pack_params.  Returns (B, 1) f32."""
    B, S = state.shape
    w1, w2, w3, b = packed["w1"], packed["w2"], packed["w3"], packed["b"]
    h1, h2, h3 = packed["dims"]
    off1, off2, off3 = packed["offsets"]
    assert w1.shape == (h1, S) and w2.shape == (h2, h1) and w3.shape == (h3, h2)

    # Batch on the lane axis (the review's dominant layout fix).
    x_t = jnp.transpose(state)                       # (S, B)

    tb = _pick_tile(B, tile_lanes if tile_lanes is not None else _MAX_TILE_LANES)
    grid = (pl.cdiv(B, tb),)
    const = lambda i: (0, 0)                         # weights/biases resident across steps

    kernel = _make_kernel(h1, h2, h3, off1, off2, off3)
    v = pl.pallas_call(
        kernel,
        out_shape=jax.ShapeDtypeStruct((1, B), jnp.float32),
        grid=grid,
        in_specs=[
            pl.BlockSpec((S, tb), lambda i: (0, i)),     # state tile (lane-tiled batch)
            pl.BlockSpec(w1.shape, const),
            pl.BlockSpec(w2.shape, const),
            pl.BlockSpec(w3.shape, const),
            pl.BlockSpec(b.shape, const),
        ],
        out_specs=pl.BlockSpec((1, tb), lambda i: (0, i)),  # lane-dense output slab
        compiler_params=pltpu.CompilerParams(
            dimension_semantics=("parallel",),              # megacore split on v7x
        ),
    )(x_t, w1, w2, w3, b)
    return v.reshape(B, 1)


def init_params(key, num_state):
    """Mirror the PyTorch module init: weights ~ N(0, 0.1) in (out, in) orientation;
    biases use nn.Linear's default U(-1/sqrt(fan_in), 1/sqrt(fan_in))."""
    k1, k2, k3, kb1, kb2, kb3 = jax.random.split(key, 6)
    w1 = jax.random.normal(k1, (50, num_state), jnp.float32) * 0.1
    w2 = jax.random.normal(k2, (20, 50), jnp.float32) * 0.1
    w3 = jax.random.normal(k3, (1, 20), jnp.float32) * 0.1
    b1 = jax.random.uniform(kb1, (50,), jnp.float32, -1.0, 1.0) / jnp.sqrt(float(num_state))
    b2 = jax.random.uniform(kb2, (20,), jnp.float32, -1.0, 1.0) / jnp.sqrt(50.0)
    b3 = jax.random.uniform(kb3, (1,), jnp.float32, -1.0, 1.0) / jnp.sqrt(20.0)
    return {"w1": w1, "w2": w2, "w3": w3, "b1": b1, "b2": b2, "b3": b3}


def critic_ref(state, params):
    """Pure-JAX fp32 reference (matches the PyTorch fp32 forward)."""
    h1 = jnp.maximum(jnp.dot(state, params["w1"].T, precision=_PREC) + params["b1"], 0.0)
    h2 = jnp.maximum(jnp.dot(h1, params["w2"].T, precision=_PREC) + params["b2"], 0.0)
    return jnp.dot(h2, params["w3"].T, precision=_PREC) + params["b3"]


if __name__ == "__main__":
    key = jax.random.PRNGKey(0)
    k_param, k_state, k_state2 = jax.random.split(key, 3)

    num_state = 8
    params = init_params(k_param, num_state)
    packed = pack_params(params)                     # one-time packing (hoisted out of forward)

    # Small batch: single full-dim block.
    state_small = jax.random.normal(k_state, (4, num_state), jnp.float32)
    v_small = critic_forward(state_small, packed)
    jax.block_until_ready(v_small)
    assert v_small.shape == (4, 1)
    assert jnp.allclose(v_small, critic_ref(state_small, params), atol=1e-5, rtol=1e-5)

    # Larger, non-multiple-of-128 batch with a small explicit lane tile to exercise
    # the multi-step grid and the masked partial last tile.
    state_big = jax.random.normal(k_state2, (300, num_state), jnp.float32)
    v_big = critic_forward(state_big, packed, tile_lanes=128)
    jax.block_until_ready(v_big)
    assert v_big.shape == (300, 1)
    assert jnp.allclose(v_big, critic_ref(state_big, params), atol=1e-5, rtol=1e-5)

    print("KERNEL_OK")
</pallas_src>

<mosaic_0001>
module attributes {stable_mosaic.version = 11 : i64} {
  func.func @kernel(%arg0: i32, %arg1: memref<8x4xf32, #tpu.memory_space<vmem>>, %arg2: memref<50x8xf32, #tpu.memory_space<vmem>>, %arg3: memref<20x50xf32, #tpu.memory_space<vmem>>, %arg4: memref<1x20xf32, #tpu.memory_space<vmem>>, %arg5: memref<88x1xf32, #tpu.memory_space<vmem>>, %arg6: memref<1x4xf32, #tpu.memory_space<vmem>>) attributes {dimension_semantics = [#tpu.dimension_semantics<parallel>], iteration_bounds = array<i64: 1>, scalar_prefetch = 0 : i64, scratch_operands = 0 : i64, tpu.core_type = #tpu.core_type<tc>, window_params = [{transform_indices = @transform_0, window_bounds = array<i64: 8, 4>}, {pipeline_mode = #tpu.pipeline_mode<synchronous>, transform_indices = @transform_1, window_bounds = array<i64: 50, 8>}, {pipeline_mode = #tpu.pipeline_mode<synchronous>, transform_indices = @transform_2, window_bounds = array<i64: 20, 50>}, {pipeline_mode = #tpu.pipeline_mode<synchronous>, transform_indices = @transform_3, window_bounds = array<i64: 1, 20>}, {pipeline_mode = #tpu.pipeline_mode<synchronous>, transform_indices = @transform_4, window_bounds = array<i64: 88, 1>}, {transform_indices = @transform_5, window_bounds = array<i64: 1, 4>}]} {
    %c0 = arith.constant 0 : index
    %c0_0 = arith.constant 0 : index
    %0 = vector.load %arg1[%c0, %c0_0] : memref<8x4xf32, #tpu.memory_space<vmem>>, vector<8x4xf32>
    %c0_1 = arith.constant 0 : index
    %c0_2 = arith.constant 0 : index
    %1 = vector.load %arg5[%c0_1, %c0_2] : memref<88x1xf32, #tpu.memory_space<vmem>>, vector<88x1xf32>
    %2 = vector.extract_strided_slice %1 {offsets = [0, 0], sizes = [50, 1], strides = [1, 1]} : vector<88x1xf32> to vector<50x1xf32>
    %3 = vector.extract_strided_slice %1 {offsets = [56, 0], sizes = [20, 1], strides = [1, 1]} : vector<88x1xf32> to vector<20x1xf32>
    %4 = vector.extract_strided_slice %1 {offsets = [80, 0], sizes = [1, 1], strides = [1, 1]} : vector<88x1xf32> to vector<1x1xf32>
    %c0_3 = arith.constant 0 : index
    %c0_4 = arith.constant 0 : index
    %5 = vector.load %arg2[%c0_3, %c0_4] : memref<50x8xf32, #tpu.memory_space<vmem>>, vector<50x8xf32>
    %cst = arith.constant dense<0.000000e+00> : vector<50x4xf32>
    %6 = tpu.matmul %5, %0, %cst {dimension_numbers = #tpu.dot_dimension_numbers<[1], [0], [0], [1], [0, 0, 1, 1], [], []>, precision = #tpu.contract_precision<fp32>} : vector<50x8xf32>, vector<8x4xf32>, vector<50x4xf32> -> vector<50x4xf32>
    %7 = vector.broadcast %2 : vector<50x1xf32> to vector<50x4xf32>
    %8 = arith.addf %6, %7 : vector<50x4xf32>
    %cst_5 = arith.constant 0.000000e+00 : f32
    %9 = vector.broadcast %cst_5 : f32 to vector<50x4xf32>
    %10 = arith.maximumf %8, %9 : vector<50x4xf32>
    %c0_6 = arith.constant 0 : index
    %c0_7 = arith.constant 0 : index
    %11 = vector.load %arg3[%c0_6, %c0_7] : memref<20x50xf32, #tpu.memory_space<vmem>>, vector<20x50xf32>
    %cst_8 = arith.constant dense<0.000000e+00> : vector<20x4xf32>
    %12 = tpu.matmul %11, %10, %cst_8 {dimension_numbers = #tpu.dot_dimension_numbers<[1], [0], [0], [1], [0, 0, 1, 1], [], []>, precision = #tpu.contract_precision<fp32>} : vector<20x50xf32>, vector<50x4xf32>, vector<20x4xf32> -> vector<20x4xf32>
    %13 = vector.broadcast %3 : vector<20x1xf32> to vector<20x4xf32>
    %14 = arith.addf %12, %13 : vector<20x4xf32>
    %cst_9 = arith.constant 0.000000e+00 : f32
    %15 = vector.broadcast %cst_9 : f32 to vector<20x4xf32>
    %16 = arith.maximumf %14, %15 : vector<20x4xf32>
    %c0_10 = arith.constant 0 : index
    %c0_11 = arith.constant 0 : index
    %17 = vector.load %arg4[%c0_10, %c0_11] : memref<1x20xf32, #tpu.memory_space<vmem>>, vector<1x20xf32>
    %cst_12 = arith.constant dense<0.000000e+00> : vector<1x4xf32>
    %18 = tpu.matmul %17, %16, %cst_12 {dimension_numbers = #tpu.dot_dimension_numbers<[1], [0], [0], [1], [0, 0, 1, 1], [], []>, precision = #tpu.contract_precision<fp32>} : vector<1x20xf32>, vector<20x4xf32>, vector<1x4xf32> -> vector<1x4xf32>
    %19 = vector.broadcast %4 : vector<1x1xf32> to vector<1x4xf32>
    %20 = arith.addf %18, %19 : vector<1x4xf32>
    %c0_13 = arith.constant 0 : index
    %c0_14 = arith.constant 0 : index
    %21 = vector.load %arg6[%c0_13, %c0_14] : memref<1x4xf32, #tpu.memory_space<vmem>>, vector<1x4xf32>
    tpu.vector_store %arg6[%c0_13, %c0_14], %20 {strides = array<i32>} : memref<1x4xf32, #tpu.memory_space<vmem>>, vector<1x4xf32>,
    return
  }
  func.func @transform_0(%arg0: i32) -> (i32, i32) {
    %c0_i32 = arith.constant 0 : i32
    %c0_i32_0 = arith.constant 0 : i32
    return %c0_i32, %arg0 : i32, i32
  }
  func.func @transform_1(%arg0: i32) -> (i32, i32) {
    %c0_i32 = arith.constant 0 : i32
    %c0_i32_0 = arith.constant 0 : i32
    %c0_i32_1 = arith.constant 0 : i32
    return %c0_i32, %c0_i32_0 : i32, i32
  }
  func.func @transform_2(%arg0: i32) -> (i32, i32) {
    %c0_i32 = arith.constant 0 : i32
    %c0_i32_0 = arith.constant 0 : i32
    %c0_i32_1 = arith.constant 0 : i32
    return %c0_i32, %c0_i32_0 : i32, i32
  }
  func.func @transform_3(%arg0: i32) -> (i32, i32) {
    %c0_i32 = arith.constant 0 : i32
    %c0_i32_0 = arith.constant 0 : i32
    %c0_i32_1 = arith.constant 0 : i32
    return %c0_i32, %c0_i32_0 : i32, i32
  }
  func.func @transform_4(%arg0: i32) -> (i32, i32) {
    %c0_i32 = arith.constant 0 : i32
    %c0_i32_0 = arith.constant 0 : i32
    %c0_i32_1 = arith.constant 0 : i32
    return %c0_i32, %c0_i32_0 : i32, i32
  }
  func.func @transform_5(%arg0: i32) -> (i32, i32) {
    %c0_i32 = arith.constant 0 : i32
    %c0_i32_0 = arith.constant 0 : i32
    return %c0_i32, %arg0 : i32, i32
  }
}

</mosaic_0001>

<llo_original>
// kernel: tpu_custom_call.1
$region0: #{tpu_custom_call.1}
  #allocation0 [shape = 'u32[]', space=smem, size = 0x4, offset = 0x4, fixed_abs, tag = 'smem constant byte address 0x4 - core index']
  #allocation1 [shape = 'u32[144,128]{1,0:T(1,128)}', space=vmem, size = 0x12000, scoped, tag = 'internal scratch']
  %s0 = inlined_call_operand.vmem [shape: f32[8,4], index: 0, kind: input, shape index: {}]
  %s1 = inlined_call_operand.vmem [shape: f32[50,8], index: 1, kind: input, shape index: {}]
  %s2 = inlined_call_operand.vmem [shape: f32[20,50], index: 2, kind: input, shape index: {}]
  %s3 = inlined_call_operand.vmem [shape: f32[1,20], index: 3, kind: input, shape index: {}]
  %s4 = inlined_call_operand.vmem [shape: f32[88,1], index: 4, kind: input, shape index: {}]
  %s5 = inlined_call_operand.hbm [shape: f32[1,4], index: 5, kind: output, shape index: {}]
  %s6 = sld [smem:[#allocation0]]
  $region30: #{tpu_custom_call.1} parent=0
    _
  %s8 = ssub.s32 1, %s6
  %s9 = scalar_select 0, %s8, %s6
  $region1: #{tpu_custom_call.1} parent=0
    #allocation2 [shape = 'u8[512]{0}', space=vmem, size = 0x400, scoped, tag = 'output window, operand 0, single buffered']
    #allocation3 [shape = 's32[1]{0}', space=sflag, size = 0x4, scoped, tag = 'scoped memory for tpu_custom_call.1']
    %10 = vsyncpa [#allocation3], 0
    // Predicated region
    $region2: #{tpu_custom_call.1} parent=1 // pred_check
      _
    $region3: #{tpu_custom_call.1} parent=1 // pred_check_branch
      %12 = sbr.rel (0) target = $region5
    $region4: #{tpu_custom_call.1} parent=1 // pred_region
      _
    $region5: #{tpu_custom_call.1} parent=1 // pred_fallthru
      _
    // Predicated region
    $region6: #{tpu_custom_call.1} parent=1 // pred_check
      _
    $region7: #{tpu_custom_call.1} parent=1 // pred_check_branch
      %14 = sbr.rel (0) target = $region9
    $region8: #{tpu_custom_call.1} parent=1 // pred_region
      _
    $region9: #{tpu_custom_call.1} parent=1 // pred_fallthru
      _
    // Predicated region
    $region10: #{tpu_custom_call.1} parent=1 // pred_check
      _
    $region11: #{tpu_custom_call.1} parent=1 // pred_check_branch
      %16 = sbr.rel (0) target = $region13
    $region12: #{tpu_custom_call.1} parent=1 // pred_region
      _
    $region13: #{tpu_custom_call.1} parent=1 // pred_fallthru
      _
    // Predicated region
    $region14: #{tpu_custom_call.1} parent=1 // pred_check
      _
    $region15: #{tpu_custom_call.1} parent=1 // pred_check_branch
      %18 = sbr.rel (0) target = $region17
    $region16: #{tpu_custom_call.1} parent=1 // pred_region
      _
    $region17: #{tpu_custom_call.1} parent=1 // pred_fallthru
      _
    // Predicated region
    $region18: #{tpu_custom_call.1} parent=1 // pred_check
      _
    $region19: #{tpu_custom_call.1} parent=1 // pred_check_branch
      %20 = sbr.rel (0) target = $region21
    $region20: #{tpu_custom_call.1} parent=1 // pred_region
      _
    $region21: #{tpu_custom_call.1} parent=1 // pred_fallthru
      _
    %v21 = vld [vmem:[%s0] sm:$0xff]
    %v22 = vld [vmem:[%s4] sm:$0xff]
    %v23 = vld [vmem:[%s4 + $0x8] sm:$0xff]
    %v24 = vld [vmem:[%s4 + $0x10] sm:$0xff]
    %v25 = vld [vmem:[%s4 + $0x18] sm:$0xff]
    %v26 = vld [vmem:[%s4 + $0x20] sm:$0xff]
    %v27 = vld [vmem:[%s4 + $0x28] sm:$0xff]
    %v28 = vld [vmem:[%s4 + $0x30] sm:$0xff]
    %v29 = vld [vmem:[%s4 + $0x38] sm:$0xff]
    %v30 = vld [vmem:[%s4 + $0x40] sm:$0xff]
    %v31 = vld [vmem:[%s4 + $0x48] sm:$0xff]
    %v32 = vld [vmem:[%s4 + $0x50] sm:$0xff]
    %v33 = vld [vmem:[%s1] sm:$0xff]
    %v34 = vld [vmem:[%s1 + $0x8] sm:$0xff]
    %v35 = vld [vmem:[%s1 + $0x10] sm:$0xff]
    %v36 = vld [vmem:[%s1 + $0x18] sm:$0xff]
    %v37 = vld [vmem:[%s1 + $0x20] sm:$0xff]
    %v38 = vld [vmem:[%s1 + $0x28] sm:$0xff]
    %v39 = vld [vmem:[%s1 + $0x30] sm:$0x3]
    %41 = vset.pattern.permute.xlu0 0
    %42 = vperm.xlu0 %41, %v22
    %v43 = vpop.permute.xlu0 %42
    %46 = vset.pattern.permute.xlu0 0
    %47 = vperm.xlu0 %46, %v23
    %v48 = vpop.permute.xlu0 %47
    %51 = vset.pattern.permute.xlu0 0
    %52 = vperm.xlu0 %51, %v24
    %v53 = vpop.permute.xlu0 %52
    %56 = vset.pattern.permute.xlu0 0
    %57 = vperm.xlu0 %56, %v25
    %v58 = vpop.permute.xlu0 %57
    %61 = vset.pattern.permute.xlu0 0
    %62 = vperm.xlu0 %61, %v26
    %v63 = vpop.permute.xlu0 %62
    %66 = vset.pattern.permute.xlu0 0
    %67 = vperm.xlu0 %66, %v27
    %v68 = vpop.permute.xlu0 %67
    %71 = vset.pattern.permute.xlu0 0
    %72 = vperm.xlu0 %71, %v28
    %v73 = vpop.permute.xlu0 %72
    %vm75 = vcmask 64512
    %v77 = vsel %vm75, %v33, 0
    %v80 = vsel %vm75, %v34, 0
    %v83 = vsel %vm75, %v35, 0
    %v86 = vsel %vm75, %v36, 0
    %v89 = vsel %vm75, %v37, 0
    %v92 = vsel %vm75, %v38, 0
    %v95 = vsel %vm75, %v39, 0
    %97 = vmatprep.subr.mxu0 0.0
    %v98 = vand.u32 %v21, 4294901760
    %99 = vmatpush1.msra.mxu0 %v98
    %100 = vmatprep.subr.mxu0 0.0
    %101 = vmatpush1.msra.mxu0 0.0
    %102 = vmatprep.subr.mxu0 0.0
    %103 = vmatpush1.msra.mxu0 0.0
    %104 = vmatprep.subr.mxu0 0.0
    %105 = vmatpush1.msra.mxu0 0.0
    %106 = vmatprep.subr.mxu0 0.0
    %107 = vmatpush1.msra.mxu0 0.0
    %108 = vmatprep.subr.mxu0 0.0
    %109 = vmatpush1.msra.mxu0 0.0
    %110 = vmatprep.subr.mxu0 0.0
    %111 = vmatpush1.msra.mxu0 0.0
    %112 = vmatprep.subr.mxu0 0.0
    %113 = vmatpush1.msra.mxu0 0.0
    %114 = vmatprep.subr.mxu0 0.0
    %115 = vmatpush1.msra.mxu0 0.0
    %116 = vmatprep.subr.mxu0 0.0
    %117 = vmatpush1.msra.mxu0 0.0
    %118 = vmatprep.subr.mxu0 0.0
    %119 = vmatpush1.msra.mxu0 0.0
    %120 = vmatprep.subr.mxu0 0.0
    %121 = vmatpush1.msra.mxu0 0.0
    %122 = vmatprep.subr.mxu0 0.0
    %123 = vmatpush1.msra.mxu0 0.0
    %124 = vmatprep.subr.mxu0 0.0
    %125 = vmatpush1.msra.mxu0 0.0
    %126 = vmatprep.subr.mxu0 0.0
    %127 = vmatpush1.msra.mxu0 0.0
    %128 = vmatprep.subr.mxu0 0.0
    %129 = vmatpush1.msra.mxu0 0.0
    %130 = vmatprep.subr.mxu0 0.0
    %131 = vmatpush1.msra.mxu0 0.0
    %132 = vmatprep.subr.mxu0 0.0
    %133 = vmatpush1.msra.mxu0 0.0
    %134 = vmatprep.subr.mxu0 0.0
    %135 = vmatpush1.msra.mxu0 0.0
    %136 = vmatprep.subr.mxu0 0.0
    %137 = vmatpush1.msra.mxu0 0.0
    %138 = vmatprep.subr.mxu0 0.0
    %139 = vmatpush1.msra.mxu0 0.0
    %140 = vmatprep.subr.mxu0 0.0
    %141 = vmatpush1.msra.mxu0 0.0
    %142 = vmatprep.subr.mxu0 0.0
    %143 = vmatpush1.msra.mxu0 0.0
    %144 = vmatprep.subr.mxu0 0.0
    %145 = vmatpush1.msra.mxu0 0.0
    %146 = vmatprep.subr.mxu0 0.0
    %147 = vmatpush1.msra.mxu0 0.0
    %148 = vmatprep.subr.mxu0 0.0
    %149 = vmatpush1.msra.mxu0 0.0
    %150 = vmatprep.subr.mxu0 0.0
    %151 = vmatpush1.msra.mxu0 0.0
    %152 = vmatprep.subr.mxu0 0.0
    %153 = vmatpush1.msra.mxu0 0.0
    %154 = vmatprep.subr.mxu0 0.0
    %155 = vmatpush1.msra.mxu0 0.0
    %156 = vmatprep.subr.mxu0 0.0
    %157 = vmatpush1.msra.mxu0 0.0
    %158 = vmatprep.subr.mxu0 0.0
    %159 = vmatpush1.msra.mxu0 0.0
    %160 = vmatprep.subr.mxu0 0.0
    %161 = vmatpush1.msra.mxu0 0.0
    %162 = vmatprep.mubr.f32.mxu0 0.0
    %v163 = vand.u32 %v77, 4294901760
    %v164 = vsub.f32 %v77, %v163
    %v165 = vand.u32 %v164, 4294901760
    %v166 = vsub.f32 %v164, %v165
    %v167 = vand.u32 %v166, 4294901760
    %168 = vmatmul.mubr.f32.gmra.mrb[0].mxu0 %v167
    %v169 = vpop.f32.mrb[0].mxu0
    %v170 = vadd.f32 %v43, %v169
    %v171 = vpop.f32.mrb[0].mxu0
    %172 = vmatprep.mubr.f32.mxu0 0.0
    %v173 = vand.u32 %v80, 4294901760
    %v174 = vsub.f32 %v80, %v173
    %v175 = vand.u32 %v174, 4294901760
    %v176 = vsub.f32 %v174, %v175
    %v177 = vand.u32 %v176, 4294901760
    %178 = vmatmul.mubr.f32.gmra.mrb[0].mxu0 %v177
    %v179 = vpop.f32.mrb[0].mxu0
    %v180 = vadd.f32 %v48, %v179
    %v181 = vpop.f32.mrb[0].mxu0
    %182 = vmatprep.mubr.f32.mxu0 0.0
    %v183 = vand.u32 %v83, 4294901760
    %v184 = vsub.f32 %v83, %v183
    %v185 = vand.u32 %v184, 4294901760
    %v186 = vsub.f32 %v184, %v185
    %v187 = vand.u32 %v186, 4294901760
    %188 = vmatmul.mubr.f32.gmra.mrb[0].mxu0 %v187
    %v189 = vpop.f32.mrb[0].mxu0
    %v190 = vadd.f32 %v53, %v189
    %v191 = vpop.f32.mrb[0].mxu0
    %192 = vmatprep.mubr.f32.mxu0 0.0
    %v193 = vand.u32 %v86, 4294901760
    %v194 = vsub.f32 %v86, %v193
    %v195 = vand.u32 %v194, 4294901760
    %v196 = vsub.f32 %v194, %v195
    %v197 = vand.u32 %v196, 4294901760
    %198 = vmatmul.mubr.f32.gmra.mrb[0].mxu0 %v197
    %v199 = vpop.f32.mrb[0].mxu0
    %v200 = vadd.f32 %v58, %v199
    %v201 = vpop.f32.mrb[0].mxu0
    %202 = vmatprep.mubr.f32.mxu0 0.0
    %v203 = vand.u32 %v89, 4294901760
    %v204 = vsub.f32 %v89, %v203
    %v205 = vand.u32 %v204, 4294901760
    %v206 = vsub.f32 %v204, %v205
    %v207 = vand.u32 %v206, 4294901760
    %208 = vmatmul.mubr.f32.gmra.mrb[0].mxu0 %v207
    %v209 = vpop.f32.mrb[0].mxu0
    %v210 = vadd.f32 %v63, %v209
    %v211 = vpop.f32.mrb[0].mxu0
    %212 = vmatprep.mubr.f32.mxu0 0.0
    %v213 = vand.u32 %v92, 4294901760
    %v214 = vsub.f32 %v92, %v213
    %v215 = vand.u32 %v214, 4294901760
    %v216 = vsub.f32 %v214, %v215
    %v217 = vand.u32 %v216, 4294901760
    %218 = vmatmul.mubr.f32.gmra.mrb[0].mxu0 %v217
    %v219 = vpop.f32.mrb[0].mxu0
    %v220 = vadd.f32 %v68, %v219
    %v221 = vpop.f32.mrb[0].mxu0
    %222 = vmatprep.mubr.f32.mxu0 0.0
    %v223 = vand.u32 %v95, 4294901760
    %v224 = vsub.f32 %v95, %v223
    %v225 = vand.u32 %v224, 4294901760
    %v226 = vsub.f32 %v224, %v225
    %v227 = vand.u32 %v226, 4294901760
    %228 = vmatmul.mubr.f32.gmra.mrb[0].mxu0 %v227
    %v229 = vpop.f32.mrb[0].mxu0
    %v230 = vadd.f32 %v73, %v229
    %v231 = vpop.f32.mrb[0].mxu0
    %232 = vdwg.mxu0
    %233 = vmatprep.subr.mxu0 0.0
    %v234 = vand.u32 %v21, 4294901760
    %v235 = vsub.f32 %v21, %v234
    %v236 = vand.u32 %v235, 4294901760
    %v237 = vsub.f32 %v235, %v236
    %v238 = vand.u32 %v237, 4294901760
    %239 = vmatpush1.msra.mxu0 %v238
    %240 = vmatprep.subr.mxu0 0.0
    %241 = vmatpush1.msra.mxu0 0.0
    %242 = vmatprep.subr.mxu0 0.0
    %243 = vmatpush1.msra.mxu0 0.0
    %244 = vmatprep.subr.mxu0 0.0
    %245 = vmatpush1.msra.mxu0 0.0
    %246 = vmatprep.subr.mxu0 0.0
    %247 = vmatpush1.msra.mxu0 0.0
    %248 = vmatprep.subr.mxu0 0.0
    %249 = vmatpush1.msra.mxu0 0.0
    %250 = vmatprep.subr.mxu0 0.0
    %251 = vmatpush1.msra.mxu0 0.0
    %252 = vmatprep.subr.mxu0 0.0
    %253 = vmatpush1.msra.mxu0 0.0
    %254 = vmatprep.subr.mxu0 0.0
    %255 = vmatpush1.msra.mxu0 0.0
    %256 = vmatprep.subr.mxu0 0.0
    %257 = vmatpush1.msra.mxu0 0.0
    %258 = vmatprep.subr.mxu0 0.0
    %259 = vmatpush1.msra.mxu0 0.0
    %260 = vmatprep.subr.mxu0 0.0
    %261 = vmatpush1.msra.mxu0 0.0
    %262 = vmatprep.subr.mxu0 0.0
    %263 = vmatpush1.msra.mxu0 0.0
    %264 = vmatprep.subr.mxu0 0.0
    %265 = vmatpush1.msra.mxu0 0.0
    %266 = vmatprep.subr.mxu0 0.0
    %267 = vmatpush1.msra.mxu0 0.0
    %268 = vmatprep.subr.mxu0 0.0
    %269 = vmatpush1.msra.mxu0 0.0
    %270 = vmatprep.subr.mxu0 0.0
    %271 = vmatpush1.msra.mxu0 0.0
    %272 = vmatprep.subr.mxu0 0.0
    %273 = vmatpush1.msra.mxu0 0.0
    %274 = vmatprep.subr.mxu0 0.0
    %275 = vmatpush1.msra.mxu0 0.0
    %276 = vmatprep.subr.mxu0 0.0
    %277 = vmatpush1.msra.mxu0 0.0
    %278 = vmatprep.subr.mxu0 0.0
    %279 = vmatpush1.msra.mxu0 0.0
    %280 = vmatprep.subr.mxu0 0.0
    %281 = vmatpush1.msra.mxu0 0.0
    %282 = vmatprep.subr.mxu0 0.0
    %283 = vmatpush1.msra.mxu0 0.0
    %284 = vmatprep.subr.mxu0 0.0
    %285 = vmatpush1.msra.mxu0 0.0
    %286 = vmatprep.subr.mxu0 0.0
    %287 = vmatpush1.msra.mxu0 0.0
    %288 = vmatprep.subr.mxu0 0.0
    %289 = vmatpush1.msra.mxu0 0.0
    %290 = vmatprep.subr.mxu0 0.0
    %291 = vmatpush1.msra.mxu0 0.0
    %292 = vmatprep.subr.mxu0 0.0
    %293 = vmatpush1.msra.mxu0 0.0
    %294 = vmatprep.subr.mxu0 0.0
    %295 = vmatpush1.msra.mxu0 0.0
    %296 = vmatprep.subr.mxu0 0.0
    %297 = vmatpush1.msra.mxu0 0.0
    %298 = vmatprep.subr.mxu0 0.0
    %299 = vmatpush1.msra.mxu0 0.0
    %300 = vmatprep.subr.mxu0 0.0
    %301 = vmatpush1.msra.mxu0 0.0
    %302 = vmatprep.mubr.f32.mxu0 0.0
    %v303 = vand.u32 %v77, 4294901760
    %304 = vmatmul.mubr.f32.gmra.mrb[0].mxu0 %v303
    %v305 = vpop.f32.mrb[0].mxu0
    %v306 = vadd.f32 %v170, %v305
    %v307 = vpop.f32.mrb[0].mxu0
    %308 = vmatprep.mubr.f32.mxu0 0.0
    %v309 = vand.u32 %v80, 4294901760
    %310 = vmatmul.mubr.f32.gmra.mrb[0].mxu0 %v309
    %v311 = vpop.f32.mrb[0].mxu0
    %v312 = vadd.f32 %v180, %v311
    %v313 = vpop.f32.mrb[0].mxu0
    %314 = vmatprep.mubr.f32.mxu0 0.0
    %v315 = vand.u32 %v83, 4294901760
    %316 = vmatmul.mubr.f32.gmra.mrb[0].mxu0 %v315
    %v317 = vpop.f32.mrb[0].mxu0
    %v318 = vadd.f32 %v190, %v317
    %v319 = vpop.f32.mrb[0].mxu0
    %320 = vmatprep.mubr.f32.mxu0 0.0
    %v321 = vand.u32 %v86, 4294901760
    %322 = vmatmul.mubr.f32.gmra.mrb[0].mxu0 %v321
    %v323 = vpop.f32.mrb[0].mxu0
    %v324 = vadd.f32 %v200, %v323
    %v325 = vpop.f32.mrb[0].mxu0
    %326 = vmatprep.mubr.f32.mxu0 0.0
    %v327 = vand.u32 %v89, 4294901760
    %328 = vmatmul.mubr.f32.gmra.mrb[0].mxu0 %v327
    %v329 = vpop.f32.mrb[0].mxu0
    %v330 = vadd.f32 %v210, %v329
    %v331 = vpop.f32.mrb[0].mxu0
    %332 = vmatprep.mubr.f32.mxu0 0.0
    %v333 = vand.u32 %v92, 4294901760
    %334 = vmatmul.mubr.f32.gmra.mrb[0].mxu0 %v333
    %v335 = vpop.f32.mrb[0].mxu0
    %v336 = vadd.f32 %v220, %v335
    %v337 = vpop.f32.mrb[0].mxu0
    %338 = vmatprep.mubr.f32.mxu0 0.0
    %v339 = vand.u32 %v95, 4294901760
    %340 = vmatmul.mubr.f32.gmra.mrb[0].mxu0 %v339
    %v341 = vpop.f32.mrb[0].mxu0
    %v342 = vadd.f32 %v230, %v341
    %v343 = vpop.f32.mrb[0].mxu0
    %344 = vdwg.mxu0
    %345 = vmatprep.subr.mxu0 0.0
    %v346 = vand.u32 %v21, 4294901760
    %v347 = vsub.f32 %v21, %v346
    %348 = vmatpush1.msra.mxu0 %v347
    %349 = vmatprep.subr.mxu0 0.0
    %350 = vmatpush1.msra.mxu0 0.0
    %351 = vmatprep.subr.mxu0 0.0
    %352 = vmatpush1.msra.mxu0 0.0
    %353 = vmatprep.subr.mxu0 0.0
    %354 = vmatpush1.msra.mxu0 0.0
    %355 = vmatprep.subr.mxu0 0.0
    %356 = vmatpush1.msra.mxu0 0.0
    %357 = vmatprep.subr.mxu0 0.0
    %358 = vmatpush1.msra.mxu0 0.0
    %359 = vmatprep.subr.mxu0 0.0
    %360 = vmatpush1.msra.mxu0 0.0
    %361 = vmatprep.subr.mxu0 0.0
    %362 = vmatpush1.msra.mxu0 0.0
    %363 = vmatprep.subr.mxu0 0.0
    %364 = vmatpush1.msra.mxu0 0.0
    %365 = vmatprep.subr.mxu0 0.0
    %366 = vmatpush1.msra.mxu0 0.0
    %367 = vmatprep.subr.mxu0 0.0
    %368 = vmatpush1.msra.mxu0 0.0
    %369 = vmatprep.subr.mxu0 0.0
    %370 = vmatpush1.msra.mxu0 0.0
    %371 = vmatprep.subr.mxu0 0.0
    %372 = vmatpush1.msra.mxu0 0.0
    %373 = vmatprep.subr.mxu0 0.0
    %374 = vmatpush1.msra.mxu0 0.0
    %375 = vmatprep.subr.mxu0 0.0
    %376 = vmatpush1.msra.mxu0 0.0
    %377 = vmatprep.subr.mxu0 0.0
    %378 = vmatpush1.msra.mxu0 0.0
    %379 = vmatprep.subr.mxu0 0.0
    %380 = vmatpush1.msra.mxu0 0.0
    %381 = vmatprep.subr.mxu0 0.0
    %382 = vmatpush1.msra.mxu0 0.0
    %383 = vmatprep.subr.mxu0 0.0
    %384 = vmatpush1.msra.mxu0 0.0
    %385 = vmatprep.subr.mxu0 0.0
    %386 = vmatpush1.msra.mxu0 0.0
    %387 = vmatprep.subr.mxu0 0.0
    %388 = vmatpush1.msra.mxu0 0.0
    %389 = vmatprep.subr.mxu0 0.0
    %390 = vmatpush1.msra.mxu0 0.0
    %391 = vmatprep.subr.mxu0 0.0
    %392 = vmatpush1.msra.mxu0 0.0
    %393 = vmatprep.subr.mxu0 0.0
    %394 = vmatpush1.msra.mxu0 0.0
    %395 = vmatprep.subr.mxu0 0.0
    %396 = vmatpush1.msra.mxu0 0.0
    %397 = vmatprep.subr.mxu0 0.0
    %398 = vmatpush1.msra.mxu0 0.0
    %399 = vmatprep.subr.mxu0 0.0
    %400 = vmatpush1.msra.mxu0 0.0
    %401 = vmatprep.subr.mxu0 0.0
    %402 = vmatpush1.msra.mxu0 0.0
    %403 = vmatprep.subr.mxu0 0.0
    %404 = vmatpush1.msra.mxu0 0.0
    %405 = vmatprep.subr.mxu0 0.0
    %406 = vmatpush1.msra.mxu0 0.0
    %407 = vmatprep.subr.mxu0 0.0
    %408 = vmatpush1.msra.mxu0 0.0
    %409 = vmatprep.subr.mxu0 0.0
    %410 = vmatpush1.msra.mxu0 0.0
    %411 = vmatprep.mubr.f32.mxu0 0.0
    %v412 = vand.u32 %v77, 4294901760
    %v413 = vsub.f32 %v77, %v412
    %414 = vmatmul.mubr.f32.gmra.mrb[0].mxu0 %v413
    %v415 = vpop.f32.mrb[0].mxu0
    %v416 = vadd.f32 %v306, %v415
    %v417 = vpop.f32.mrb[0].mxu0
    %418 = vmatprep.mubr.f32.mxu0 0.0
    %v419 = vand.u32 %v80, 4294901760
    %v420 = vsub.f32 %v80, %v419
    %421 = vmatmul.mubr.f32.gmra.mrb[0].mxu0 %v420
    %v422 = vpop.f32.mrb[0].mxu0
    %v423 = vadd.f32 %v312, %v422
    %v424 = vpop.f32.mrb[0].mxu0
    %425 = vmatprep.mubr.f32.mxu0 0.0
    %v426 = vand.u32 %v83, 4294901760
    %v427 = vsub.f32 %v83, %v426
    %428 = vmatmul.mubr.f32.gmra.mrb[0].mxu0 %v427
    %v429 = vpop.f32.mrb[0].mxu0
    %v430 = vadd.f32 %v318, %v429
    %v431 = vpop.f32.mrb[0].mxu0
    %432 = vmatprep.mubr.f32.mxu0 0.0
    %v433 = vand.u32 %v86, 4294901760
    %v434 = vsub.f32 %v86, %v433
    %435 = vmatmul.mubr.f32.gmra.mrb[0].mxu0 %v434
    %v436 = vpop.f32.mrb[0].mxu0
    %v437 = vadd.f32 %v324, %v436
    %v438 = vpop.f32.mrb[0].mxu0
    %439 = vmatprep.mubr.f32.mxu0 0.0
    %v440 = vand.u32 %v89, 4294901760
    %v441 = vsub.f32 %v89, %v440
    %442 = vmatmul.mubr.f32.gmra.mrb[0].mxu0 %v441
    %v443 = vpop.f32.mrb[0].mxu0
    %v444 = vadd.f32 %v330, %v443
    %v445 = vpop.f32.mrb[0].mxu0
    %446 = vmatprep.mubr.f32.mxu0 0.0
    %v447 = vand.u32 %v92, 4294901760
    %v448 = vsub.f32 %v92, %v447
    %449 = vmatmul.mubr.f32.gmra.mrb[0].mxu0 %v448
    %v450 = vpop.f32.mrb[0].mxu0
    %v451 = vadd.f32 %v336, %v450
    %v452 = vpop.f32.mrb[0].mxu0
    %453 = vmatprep.mubr.f32.mxu0 0.0
    %v454 = vand.u32 %v95, 4294901760
    %v455 = vsub.f32 %v95, %v454
    %456 = vmatmul.mubr.f32.gmra.mrb[0].mxu0 %v455
    %v457 = vpop.f32.mrb[0].mxu0
    %v458 = vadd.f32 %v342, %v457
    %v459 = vpop.f32.mrb[0].mxu0
    %460 = vdwg.mxu0
    %461 = vmatprep.subr.mxu0 0.0
    %v462 = vand.u32 %v21, 4294901760
    %463 = vmatpush1.msra.mxu0 %v462
    %464 = vmatprep.subr.mxu0 0.0
    %465 = vmatpush1.msra.mxu0 0.0
    %466 = vmatprep.subr.mxu0 0.0
    %467 = vmatpush1.msra.mxu0 0.0
    %468 = vmatprep.subr.mxu0 0.0
    %469 = vmatpush1.msra.mxu0 0.0
    %470 = vmatprep.subr.mxu0 0.0
    %471 = vmatpush1.msra.mxu0 0.0
    %472 = vmatprep.subr.mxu0 0.0
    %473 = vmatpush1.msra.mxu0 0.0
    %474 = vmatprep.subr.mxu0 0.0
    %475 = vmatpush1.msra.mxu0 0.0
    %476 = vmatprep.subr.mxu0 0.0
    %477 = vmatpush1.msra.mxu0 0.0
    %478 = vmatprep.subr.mxu0 0.0
    %479 = vmatpush1.msra.mxu0 0.0
    %480 = vmatprep.subr.mxu0 0.0
    %481 = vmatpush1.msra.mxu0 0.0
    %482 = vmatprep.subr.mxu0 0.0
    %483 = vmatpush1.msra.mxu0 0.0
    %484 = vmatprep.subr.mxu0 0.0
    %485 = vmatpush1.msra.mxu0 0.0
    %486 = vmatprep.subr.mxu0 0.0
    %487 = vmatpush1.msra.mxu0 0.0
    %488 = vmatprep.subr.mxu0 0.0
    %489 = vmatpush1.msra.mxu0 0.0
    %490 = vmatprep.subr.mxu0 0.0
    %491 = vmatpush1.msra.mxu0 0.0
    %492 = vmatprep.subr.mxu0 0.0
    %493 = vmatpush1.msra.mxu0 0.0
    %494 = vmatprep.subr.mxu0 0.0
    %495 = vmatpush1.msra.mxu0 0.0
    %496 = vmatprep.subr.mxu0 0.0
    %497 = vmatpush1.msra.mxu0 0.0
    %498 = vmatprep.subr.mxu0 0.0
    %499 = vmatpush1.msra.mxu0 0.0
    %500 = vmatprep.subr.mxu0 0.0
    %501 = vmatpush1.msra.mxu0 0.0
    %502 = vmatprep.subr.mxu0 0.0
    %503 = vmatpush1.msra.mxu0 0.0
    %504 = vmatprep.subr.mxu0 0.0
    %505 = vmatpush1.msra.mxu0 0.0
    %506 = vmatprep.subr.mxu0 0.0
    %507 = vmatpush1.msra.mxu0 0.0
    %508 = vmatprep.subr.mxu0 0.0
    %509 = vmatpush1.msra.mxu0 0.0
    %510 = vmatprep.subr.mxu0 0.0
    %511 = vmatpush1.msra.mxu0 0.0
    %512 = vmatprep.subr.mxu0 0.0
    %513 = vmatpush1.msra.mxu0 0.0
    %514 = vmatprep.subr.mxu0 0.0
    %515 = vmatpush1.msra.mxu0 0.0
    %516 = vmatprep.subr.mxu0 0.0
    %517 = vmatpush1.msra.mxu0 0.0
    %518 = vmatprep.subr.mxu0 0.0
    %519 = vmatpush1.msra.mxu0 0.0
    %520 = vmatprep.subr.mxu0 0.0
    %521 = vmatpush1.msra.mxu0 0.0
    %522 = vmatprep.subr.mxu0 0.0
    %523 = vmatpush1.msra.mxu0 0.0
    %524 = vmatprep.subr.mxu0 0.0
    %525 = vmatpush1.msra.mxu0 0.0
    %526 = vmatprep.mubr.f32.mxu0 0.0
    %v527 = vand.u32 %v77, 4294901760
    %v528 = vsub.f32 %v77, %v527
    %v529 = vand.u32 %v528, 4294901760
    %530 = vmatmul.mubr.f32.gmra.mrb[0].mxu0 %v529
    %v531 = vpop.f32.mrb[0].mxu0
    %v532 = vadd.f32 %v416, %v531
    %v533 = vpop.f32.mrb[0].mxu0
    %534 = vmatprep.mubr.f32.mxu0 0.0
    %v535 = vand.u32 %v80, 4294901760
    %v536 = vsub.f32 %v80, %v535
    %v537 = vand.u32 %v536, 4294901760
    %538 = vmatmul.mubr.f32.gmra.mrb[0].mxu0 %v537
    %v539 = vpop.f32.mrb[0].mxu0
    %v540 = vadd.f32 %v423, %v539
    %v541 = vpop.f32.mrb[0].mxu0
    %542 = vmatprep.mubr.f32.mxu0 0.0
    %v543 = vand.u32 %v83, 4294901760
    %v544 = vsub.f32 %v83, %v543
    %v545 = vand.u32 %v544, 4294901760
    %546 = vmatmul.mubr.f32.gmra.mrb[0].mxu0 %v545
    %v547 = vpop.f32.mrb[0].mxu0
    %v548 = vadd.f32 %v430, %v547
    %v549 = vpop.f32.mrb[0].mxu0
    %550 = vmatprep.mubr.f32.mxu0 0.0
    %v551 = vand.u32 %v86, 4294901760
    %v552 = vsub.f32 %v86, %v551
    %v553 = vand.u32 %v552, 4294901760
    %554 = vmatmul.mubr.f32.gmra.mrb[0].mxu0 %v553
    %v555 = vpop.f32.mrb[0].mxu0
    %v556 = vadd.f32 %v437, %v555
    %v557 = vpop.f32.mrb[0].mxu0
    %558 = vmatprep.mubr.f32.mxu0 0.0
    %v559 = vand.u32 %v89, 4294901760
    %v560 = vsub.f32 %v89, %v559
    %v561 = vand.u32 %v560, 4294901760
    %562 = vmatmul.mubr.f32.gmra.mrb[0].mxu0 %v561
    %v563 = vpop.f32.mrb[0].mxu0
    %v564 = vadd.f32 %v444, %v563
    %v565 = vpop.f32.mrb[0].mxu0
    %566 = vmatprep.mubr.f32.mxu0 0.0
    %v567 = vand.u32 %v92, 4294901760
    %v568 = vsub.f32 %v92, %v567
    %v569 = vand.u32 %v568, 4294901760
    %570 = vmatmul.mubr.f32.gmra.mrb[0].mxu0 %v569
    %v571 = vpop.f32.mrb[0].mxu0
    %v572 = vadd.f32 %v451, %v571
    %v573 = vpop.f32.mrb[0].mxu0
    %574 = vmatprep.mubr.f32.mxu0 0.0
    %v575 = vand.u32 %v95, 4294901760
    %v576 = vsub.f32 %v95, %v575
    %v577 = vand.u32 %v576, 4294901760
    %578 = vmatmul.mubr.f32.gmra.mrb[0].mxu0 %v577
    %v579 = vpop.f32.mrb[0].mxu0
    %v580 = vadd.f32 %v458, %v579
    %v581 = vpop.f32.mrb[0].mxu0
    %582 = vdwg.mxu0
    %583 = vmatprep.subr.mxu0 0.0
    %v584 = vand.u32 %v21, 4294901760
    %v585 = vsub.f32 %v21, %v584
    %v586 = vand.u32 %v585, 4294901760
    %587 = vmatpush1.msra.mxu0 %v586
    %588 = vmatprep.subr.mxu0 0.0
    %589 = vmatpush1.msra.mxu0 0.0
    %590 = vmatprep.subr.mxu0 0.0
    %591 = vmatpush1.msra.mxu0 0.0
    %592 = vmatprep.subr.mxu0 0.0
    %593 = vmatpush1.msra.mxu0 0.0
    %594 = vmatprep.subr.mxu0 0.0
    %595 = vmatpush1.msra.mxu0 0.0
    %596 = vmatprep.subr.mxu0 0.0
    %597 = vmatpush1.msra.mxu0 0.0
    %598 = vmatprep.subr.mxu0 0.0
    %599 = vmatpush1.msra.mxu0 0.0
    %600 = vmatprep.subr.mxu0 0.0
    %601 = vmatpush1.msra.mxu0 0.0
    %602 = vmatprep.subr.mxu0 0.0
    %603 = vmatpush1.msra.mxu0 0.0
    %604 = vmatprep.subr.mxu0 0.0
    %605 = vmatpush1.msra.mxu0 0.0
    %606 = vmatprep.subr.mxu0 0.0
    %607 = vmatpush1.msra.mxu0 0.0
    %608 = vmatprep.subr.mxu0 0.0
    %609 = vmatpush1.msra.mxu0 0.0
    %610 = vmatprep.subr.mxu0 0.0
    %611 = vmatpush1.msra.mxu0 0.0
    %612 = vmatprep.subr.mxu0 0.0
    %613 = vmatpush1.msra.mxu0 0.0
    %614 = vmatprep.subr.mxu0 0.0
    %615 = vmatpush1.msra.mxu0 0.0
    %616 = vmatprep.subr.mxu0 0.0
    %617 = vmatpush1.msra.mxu0 0.0
    %618 = vmatprep.subr.mxu0 0.0
    %619 = vmatpush1.msra.mxu0 0.0
    %620 = vmatprep.subr.mxu0 0.0
    %621 = vmatpush1.msra.mxu0 0.0
    %622 = vmatprep.subr.mxu0 0.0
    %623 = vmatpush1.msra.mxu0 0.0
    %624 = vmatprep.subr.mxu0 0.0
    %625 = vmatpush1.msra.mxu0 0.0
    %626 = vmatprep.subr.mxu0 0.0
    %627 = vmatpush1.msra.mxu0 0.0
    %628 = vmatprep.subr.mxu0 0.0
    %629 = vmatpush1.msra.mxu0 0.0
    %630 = vmatprep.subr.mxu0 0.0
    %631 = vmatpush1.msra.mxu0 0.0
    %632 = vmatprep.subr.mxu0 0.0
    %633 = vmatpush1.msra.mxu0 0.0
    %634 = vmatprep.subr.mxu0 0.0
    %635 = vmatpush1.msra.mxu0 0.0
    %636 = vmatprep.subr.mxu0 0.0
    %637 = vmatpush1.msra.mxu0 0.0
    %638 = vmatprep.subr.mxu0 0.0
    %639 = vmatpush1.msra.mxu0 0.0
    %640 = vmatprep.subr.mxu0 0.0
    %641 = vmatpush1.msra.mxu0 0.0
    %642 = vmatprep.subr.mxu0 0.0
    %643 = vmatpush1.msra.mxu0 0.0
    %644 = vmatprep.subr.mxu0 0.0
    %645 = vmatpush1.msra.mxu0 0.0
    %646 = vmatprep.subr.mxu0 0.0
    %647 = vmatpush1.msra.mxu0 0.0
    %648 = vmatprep.subr.mxu0 0.0
    %649 = vmatpush1.msra.mxu0 0.0
    %650 = vmatprep.mubr.f32.mxu0 0.0
    %v651 = vand.u32 %v77, 4294901760
    %652 = vmatmul.mubr.f32.gmra.mrb[0].mxu0 %v651
    %v653 = vpop.f32.mrb[0].mxu0
    %v654 = vadd.f32 %v532, %v653
    %v655 = vpop.f32.mrb[0].mxu0
    %656 = vmatprep.mubr.f32.mxu0 0.0
    %v657 = vand.u32 %v80, 4294901760
    %658 = vmatmul.mubr.f32.gmra.mrb[0].mxu0 %v657
    %v659 = vpop.f32.mrb[0].mxu0
    %v660 = vadd.f32 %v540, %v659
    %v661 = vpop.f32.mrb[0].mxu0
    %662 = vmatprep.mubr.f32.mxu0 0.0
    %v663 = vand.u32 %v83, 4294901760
    %664 = vmatmul.mubr.f32.gmra.mrb[0].mxu0 %v663
    %v665 = vpop.f32.mrb[0].mxu0
    %v666 = vadd.f32 %v548, %v665
    %v667 = vpop.f32.mrb[0].mxu0
    %668 = vmatprep.mubr.f32.mxu0 0.0
    %v669 = vand.u32 %v86, 4294901760
    %670 = vmatmul.mubr.f32.gmra.mrb[0].mxu0 %v669
    %v671 = vpop.f32.mrb[0].mxu0
    %v672 = vadd.f32 %v556, %v671
    %v673 = vpop.f32.mrb[0].mxu0
    %674 = vmatprep.mubr.f32.mxu0 0.0
    %v675 = vand.u32 %v89, 4294901760
    %676 = vmatmul.mubr.f32.gmra.mrb[0].mxu0 %v675
    %v677 = vpop.f32.mrb[0].mxu0
    %v678 = vadd.f32 %v564, %v677
    %v679 = vpop.f32.mrb[0].mxu0
    %680 = vmatprep.mubr.f32.mxu0 0.0
    %v681 = vand.u32 %v92, 4294901760
    %682 = vmatmul.mubr.f32.gmra.mrb[0].mxu0 %v681
    %v683 = vpop.f32.mrb[0].mxu0
    %v684 = vadd.f32 %v572, %v683
    %v685 = vpop.f32.mrb[0].mxu0
    %686 = vmatprep.mubr.f32.mxu0 0.0
    %v687 = vand.u32 %v95, 4294901760
    %688 = vmatmul.mubr.f32.gmra.mrb[0].mxu0 %v687
    %v689 = vpop.f32.mrb[0].mxu0
    %v690 = vadd.f32 %v580, %v689
    %v691 = vpop.f32.mrb[0].mxu0
    %692 = vdwg.mxu0
    %693 = vmatprep.subr.mxu0 0.0
    %v694 = vand.u32 %v21, 4294901760
    %695 = vmatpush1.msra.mxu0 %v694
    %696 = vmatprep.subr.mxu0 0.0
    %697 = vmatpush1.msra.mxu0 0.0
    %698 = vmatprep.subr.mxu0 0.0
    %699 = vmatpush1.msra.mxu0 0.0
    %700 = vmatprep.subr.mxu0 0.0
    %701 = vmatpush1.msra.mxu0 0.0
    %702 = vmatprep.subr.mxu0 0.0
    %703 = vmatpush1.msra.mxu0 0.0
    %704 = vmatprep.subr.mxu0 0.0
    %705 = vmatpush1.msra.mxu0 0.0
    %706 = vmatprep.subr.mxu0 0.0
    %707 = vmatpush1.msra.mxu0 0.0
    %708 = vmatprep.subr.mxu0 0.0
    %709 = vmatpush1.msra.mxu0 0.0
    %710 = vmatprep.subr.mxu0 0.0
    %711 = vmatpush1.msra.mxu0 0.0
    %712 = vmatprep.subr.mxu0 0.0
    %713 = vmatpush1.msra.mxu0 0.0
    %714 = vmatprep.subr.mxu0 0.0
    %715 = vmatpush1.msra.mxu0 0.0
    %716 = vmatprep.subr.mxu0 0.0
    %717 = vmatpush1.msra.mxu0 0.0
    %718 = vmatprep.subr.mxu0 0.0
    %719 = vmatpush1.msra.mxu0 0.0
    %720 = vmatprep.subr.mxu0 0.0
    %721 = vmatpush1.msra.mxu0 0.0
    %722 = vmatprep.subr.mxu0 0.0
    %723 = vmatpush1.msra.mxu0 0.0
    %724 = vmatprep.subr.mxu0 0.0
    %725 = vmatpush1.msra.mxu0 0.0
    %726 = vmatprep.subr.mxu0 0.0
    %727 = vmatpush1.msra.mxu0 0.0
    %728 = vmatprep.subr.mxu0 0.0
    %729 = vmatpush1.msra.mxu0 0.0
    %730 = vmatprep.subr.mxu0 0.0
    %731 = vmatpush1.msra.mxu0 0.0
    %732 = vmatprep.subr.mxu0 0.0
    %733 = vmatpush1.msra.mxu0 0.0
    %734 = vmatprep.subr.mxu0 0.0
    %735 = vmatpush1.msra.mxu0 0.0
    %736 = vmatprep.subr.mxu0 0.0
    %737 = vmatpush1.msra.mxu0 0.0
    %738 = vmatprep.subr.mxu0 0.0
    %739 = vmatpush1.msra.mxu0 0.0
    %740 = vmatprep.subr.mxu0 0.0
    %741 = vmatpush1.msra.mxu0 0.0
    %742 = vmatprep.subr.mxu0 0.0
    %743 = vmatpush1.msra.mxu0 0.0
    %744 = vmatprep.subr.mxu0 0.0
    %745 = vmatpush1.msra.mxu0 0.0
    %746 = vmatprep.subr.mxu0 0.0
    %747 = vmatpush1.msra.mxu0 0.0
    %748 = vmatprep.subr.mxu0 0.0
    %749 = vmatpush1.msra.mxu0 0.0
    %750 = vmatprep.subr.mxu0 0.0
    %751 = vmatpush1.msra.mxu0 0.0
    %752 = vmatprep.subr.mxu0 0.0
    %753 = vmatpush1.msra.mxu0 0.0
    %754 = vmatprep.subr.mxu0 0.0
    %755 = vmatpush1.msra.mxu0 0.0
    %756 = vmatprep.subr.mxu0 0.0
    %757 = vmatpush1.msra.mxu0 0.0
    %758 = vmatprep.mubr.f32.mxu0 0.0
    %v759 = vand.u32 %v77, 4294901760
    %760 = vmatmul.mubr.f32.gmra.mrb[0].mxu0 %v759
    %v761 = vpop.f32.mrb[0].mxu0
    %v762 = vadd.f32 %v654, %v761
    %v763 = vpop.f32.mrb[0].mxu0
    %764 = vmatprep.mubr.f32.mxu0 0.0
    %v765 = vand.u32 %v80, 4294901760
    %766 = vmatmul.mubr.f32.gmra.mrb[0].mxu0 %v765
    %v767 = vpop.f32.mrb[0].mxu0
    %v768 = vadd.f32 %v660, %v767
    %v769 = vpop.f32.mrb[0].mxu0
    %770 = vmatprep.mubr.f32.mxu0 0.0
    %v771 = vand.u32 %v83, 4294901760
    %772 = vmatmul.mubr.f32.gmra.mrb[0].mxu0 %v771
    %v773 = vpop.f32.mrb[0].mxu0
    %v774 = vadd.f32 %v666, %v773
    %v775 = vpop.f32.mrb[0].mxu0
    %776 = vmatprep.mubr.f32.mxu0 0.0
    %v777 = vand.u32 %v86, 4294901760
    %778 = vmatmul.mubr.f32.gmra.mrb[0].mxu0 %v777
    %v779 = vpop.f32.mrb[0].mxu0
    %v780 = vadd.f32 %v672, %v779
    %v781 = vpop.f32.mrb[0].mxu0
    %782 = vmatprep.mubr.f32.mxu0 0.0
    %v783 = vand.u32 %v89, 4294901760
    %784 = vmatmul.mubr.f32.gmra.mrb[0].mxu0 %v783
    %v785 = vpop.f32.mrb[0].mxu0
    %v786 = vadd.f32 %v678, %v785
    %v787 = vpop.f32.mrb[0].mxu0
    %788 = vmatprep.mubr.f32.mxu0 0.0
    %v789 = vand.u32 %v92, 4294901760
    %790 = vmatmul.mubr.f32.gmra.mrb[0].mxu0 %v789
    %v791 = vpop.f32.mrb[0].mxu0
    %v792 = vadd.f32 %v684, %v791
    %v793 = vpop.f32.mrb[0].mxu0
    %794 = vmatprep.mubr.f32.mxu0 0.0
    %v795 = vand.u32 %v95, 4294901760
    %796 = vmatmul.mubr.f32.gmra.mrb[0].mxu0 %v795
    %v797 = vpop.f32.mrb[0].mxu0
    %v798 = vadd.f32 %v690, %v797
    %v799 = vpop.f32.mrb[0].mxu0
    %800 = vdwg.mxu0
    %v801 = vmax.f32 %v762, 0.0
    %v802 = vmax.f32 %v768, 0.0
    %v803 = vmax.f32 %v774, 0.0
    %v804 = vmax.f32 %v780, 0.0
    %v805 = vmax.f32 %v786, 0.0
    %v806 = vmax.f32 %v792, 0.0
    %v807 = vmax.f32 %v798, 0.0
    %v808 = vld [vmem:[%s2] sm:$0xff]
    %v809 = vld [vmem:[%s2 + $0x8] sm:$0xff]
    %v810 = vld [vmem:[%s2 + $0x10] sm:$0xf]
    %812 = vset.pattern.permute.xlu0 0
    %813 = vperm.xlu0 %812, %v29
    %v814 = vpop.permute.xlu0 %813
    %817 = vset.pattern.permute.xlu0 0
    %818 = vperm.xlu0 %817, %v30
    %v819 = vpop.permute.xlu0 %818
    %822 = vset.pattern.permute.xlu0 0
    %823 = vperm.xlu0 %822, %v31
    %v824 = vpop.permute.xlu0 %823
    %vm826 = vcmask 408576
    %v828 = vsel %vm826, %v808, 0
    %v831 = vsel %vm826, %v809, 0
    %v834 = vsel %vm826, %v810, 0
    %vm836 = vcmask 1041408
    %v838 = vsel %vm836, %v807, 0
    %840 = vmatprep.subr.mxu0 0.0
    %v841 = vand.u32 %v801, 4294901760
    %842 = vmatpush1.msra.mxu0 %v841
    %843 = vmatprep.subr.mxu0 0.0
    %v844 = vand.u32 %v802, 4294901760
    %845 = vmatpush1.msra.mxu0 %v844
    %846 = vmatprep.subr.mxu0 0.0
    %v847 = vand.u32 %v803, 4294901760
    %848 = vmatpush1.msra.mxu0 %v847
    %849 = vmatprep.subr.mxu0 0.0
    %v850 = vand.u32 %v804, 4294901760
    %851 = vmatpush1.msra.mxu0 %v850
    %852 = vmatprep.subr.mxu0 0.0
    %v853 = vand.u32 %v805, 4294901760
    %854 = vmatpush1.msra.mxu0 %v853
    %855 = vmatprep.subr.mxu0 0.0
    %v856 = vand.u32 %v806, 4294901760
    %857 = vmatpush1.msra.mxu0 %v856
    %858 = vmatprep.subr.mxu0 0.0
    %v859 = vand.u32 %v838, 4294901760
    %860 = vmatpush1.msra.mxu0 %v859
    %861 = vmatprep.subr.mxu0 0.0
    %862 = vmatpush1.msra.mxu0 0.0
    %863 = vmatprep.subr.mxu0 0.0
    %864 = vmatpush1.msra.mxu0 0.0
    %865 = vmatprep.subr.mxu0 0.0
    %866 = vmatpush1.msra.mxu0 0.0
    %867 = vmatprep.subr.mxu0 0.0
    %868 = vmatpush1.msra.mxu0 0.0
    %869 = vmatprep.subr.mxu0 0.0
    %870 = vmatpush1.msra.mxu0 0.0
    %871 = vmatprep.subr.mxu0 0.0
    %872 = vmatpush1.msra.mxu0 0.0
    %873 = vmatprep.subr.mxu0 0.0
    %874 = vmatpush1.msra.mxu0 0.0
    %875 = vmatprep.subr.mxu0 0.0
    %876 = vmatpush1.msra.mxu0 0.0
    %877 = vmatprep.subr.mxu0 0.0
    %878 = vmatpush1.msra.mxu0 0.0
    %879 = vmatprep.subr.mxu0 0.0
    %880 = vmatpush1.msra.mxu0 0.0
    %881 = vmatprep.subr.mxu0 0.0
    %882 = vmatpush1.msra.mxu0 0.0
    %883 = vmatprep.subr.mxu0 0.0
    %884 = vmatpush1.msra.mxu0 0.0
    %885 = vmatprep.subr.mxu0 0.0
    %886 = vmatpush1.msra.mxu0 0.0
    %887 = vmatprep.subr.mxu0 0.0
    %888 = vmatpush1.msra.mxu0 0.0
    %889 = vmatprep.subr.mxu0 0.0
    %890 = vmatpush1.msra.mxu0 0.0
    %891 = vmatprep.subr.mxu0 0.0
    %892 = vmatpush1.msra.mxu0 0.0
    %893 = vmatprep.subr.mxu0 0.0
    %894 = vmatpush1.msra.mxu0 0.0
    %895 = vmatprep.subr.mxu0 0.0
    %896 = vmatpush1.msra.mxu0 0.0
    %897 = vmatprep.subr.mxu0 0.0
    %898 = vmatpush1.msra.mxu0 0.0
    %899 = vmatprep.subr.mxu0 0.0
    %900 = vmatpush1.msra.mxu0 0.0
    %901 = vmatprep.subr.mxu0 0.0
    %902 = vmatpush1.msra.mxu0 0.0
    %903 = vmatprep.subr.mxu0 0.0
    %904 = vmatpush1.msra.mxu0 0.0
    %905 = vmatprep.subr.mxu0 0.0
    %906 = vmatpush1.msra.mxu0 0.0
    %907 = vmatprep.subr.mxu0 0.0
    %908 = vmatpush1.msra.mxu0 0.0
    %909 = vmatprep.subr.mxu0 0.0
    %910 = vmatpush1.msra.mxu0 0.0
    %911 = vmatprep.mubr.f32.mxu0 0.0
    %v912 = vand.u32 %v828, 4294901760
    %v913 = vsub.f32 %v828, %v912
    %v914 = vand.u32 %v913, 4294901760
    %v915 = vsub.f32 %v913, %v914
    %v916 = vand.u32 %v915, 4294901760
    %917 = vmatmul.mubr.f32.gmra.mrb[0].mxu0 %v916
    %v918 = vpop.f32.mrb[0].mxu0
    %v919 = vadd.f32 %v814, %v918
    %v920 = vpop.f32.mrb[0].mxu0
    %921 = vmatprep.mubr.f32.mxu0 0.0
    %v922 = vand.u32 %v831, 4294901760
    %v923 = vsub.f32 %v831, %v922
    %v924 = vand.u32 %v923, 4294901760
    %v925 = vsub.f32 %v923, %v924
    %v926 = vand.u32 %v925, 4294901760
    %927 = vmatmul.mubr.f32.gmra.mrb[0].mxu0 %v926
    %v928 = vpop.f32.mrb[0].mxu0
    %v929 = vadd.f32 %v819, %v928
    %v930 = vpop.f32.mrb[0].mxu0
    %931 = vmatprep.mubr.f32.mxu0 0.0
    %v932 = vand.u32 %v834, 4294901760
    %v933 = vsub.f32 %v834, %v932
    %v934 = vand.u32 %v933, 4294901760
    %v935 = vsub.f32 %v933, %v934
    %v936 = vand.u32 %v935, 4294901760
    %937 = vmatmul.mubr.f32.gmra.mrb[0].mxu0 %v936
    %v938 = vpop.f32.mrb[0].mxu0
    %v939 = vadd.f32 %v824, %v938
    %v940 = vpop.f32.mrb[0].mxu0
    %941 = vdwg.mxu0
    %942 = vmatprep.subr.mxu0 0.0
    %v943 = vand.u32 %v801, 4294901760
    %v944 = vsub.f32 %v801, %v943
    %v945 = vand.u32 %v944, 4294901760
    %v946 = vsub.f32 %v944, %v945
    %v947 = vand.u32 %v946, 4294901760
    %948 = vmatpush1.msra.mxu0 %v947
    %949 = vmatprep.subr.mxu0 0.0
    %v950 = vand.u32 %v802, 4294901760
    %v951 = vsub.f32 %v802, %v950
    %v952 = vand.u32 %v951, 4294901760
    %v953 = vsub.f32 %v951, %v952
    %v954 = vand.u32 %v953, 4294901760
    %955 = vmatpush1.msra.mxu0 %v954
    %956 = vmatprep.subr.mxu0 0.0
    %v957 = vand.u32 %v803, 4294901760
    %v958 = vsub.f32 %v803, %v957
    %v959 = vand.u32 %v958, 4294901760
    %v960 = vsub.f32 %v958, %v959
    %v961 = vand.u32 %v960, 4294901760
    %962 = vmatpush1.msra.mxu0 %v961
    %963 = vmatprep.subr.mxu0 0.0
    %v964 = vand.u32 %v804, 4294901760
    %v965 = vsub.f32 %v804, %v964
    %v966 = vand.u32 %v965, 4294901760
    %v967 = vsub.f32 %v965, %v966
    %v968 = vand.u32 %v967, 4294901760
    %969 = vmatpush1.msra.mxu0 %v968
    %970 = vmatprep.subr.mxu0 0.0
    %v971 = vand.u32 %v805, 4294901760
    %v972 = vsub.f32 %v805, %v971
    %v973 = vand.u32 %v972, 4294901760
    %v974 = vsub.f32 %v972, %v973
    %v975 = vand.u32 %v974, 4294901760
    %976 = vmatpush1.msra.mxu0 %v975
    %977 = vmatprep.subr.mxu0 0.0
    %v978 = vand.u32 %v806, 4294901760
    %v979 = vsub.f32 %v806, %v978
    %v980 = vand.u32 %v979, 4294901760
    %v981 = vsub.f32 %v979, %v980
    %v982 = vand.u32 %v981, 4294901760
    %983 = vmatpush1.msra.mxu0 %v982
    %984 = vmatprep.subr.mxu0 0.0
    %v985 = vand.u32 %v838, 4294901760
    %v986 = vsub.f32 %v838, %v985
    %v987 = vand.u32 %v986, 4294901760
    %v988 = vsub.f32 %v986, %v987
    %v989 = vand.u32 %v988, 4294901760
    %990 = vmatpush1.msra.mxu0 %v989
    %991 = vmatprep.subr.mxu0 0.0
    %992 = vmatpush1.msra.mxu0 0.0
    %993 = vmatprep.subr.mxu0 0.0
    %994 = vmatpush1.msra.mxu0 0.0
    %995 = vmatprep.subr.mxu0 0.0
    %996 = vmatpush1.msra.mxu0 0.0
    %997 = vmatprep.subr.mxu0 0.0
    %998 = vmatpush1.msra.mxu0 0.0
    %999 = vmatprep.subr.mxu0 0.0
    %1000 = vmatpush1.msra.mxu0 0.0
    %1001 = vmatprep.subr.mxu0 0.0
    %1002 = vmatpush1.msra.mxu0 0.0
    %1003 = vmatprep.subr.mxu0 0.0
    %1004 = vmatpush1.msra.mxu0 0.0
    %1005 = vmatprep.subr.mxu0 0.0
    %1006 = vmatpush1.msra.mxu0 0.0
    %1007 = vmatprep.subr.mxu0 0.0
    %1008 = vmatpush1.msra.mxu0 0.0
    %1009 = vmatprep.subr.mxu0 0.0
    %1010 = vmatpush1.msra.mxu0 0.0
    %1011 = vmatprep.subr.mxu0 0.0
    %1012 = vmatpush1.msra.mxu0 0.0
    %1013 = vmatprep.subr.mxu0 0.0
    %1014 = vmatpush1.msra.mxu0 0.0
    %1015 = vmatprep.subr.mxu0 0.0
    %1016 = vmatpush1.msra.mxu0 0.0
    %1017 = vmatprep.subr.mxu0 0.0
    %1018 = vmatpush1.msra.mxu0 0.0
    %1019 = vmatprep.subr.mxu0 0.0
    %1020 = vmatpush1.msra.mxu0 0.0
    %1021 = vmatprep.subr.mxu0 0.0
    %1022 = vmatpush1.msra.mxu0 0.0
    %1023 = vmatprep.subr.mxu0 0.0
    %1024 = vmatpush1.msra.mxu0 0.0
    %1025 = vmatprep.subr.mxu0 0.0
    %1026 = vmatpush1.msra.mxu0 0.0
    %1027 = vmatprep.subr.mxu0 0.0
    %1028 = vmatpush1.msra.mxu0 0.0
    %1029 = vmatprep.subr.mxu0 0.0
    %1030 = vmatpush1.msra.mxu0 0.0
    %1031 = vmatprep.subr.mxu0 0.0
    %1032 = vmatpush1.msra.mxu0 0.0
    %1033 = vmatprep.subr.mxu0 0.0
    %1034 = vmatpush1.msra.mxu0 0.0
    %1035 = vmatprep.subr.mxu0 0.0
    %1036 = vmatpush1.msra.mxu0 0.0
    %1037 = vmatprep.subr.mxu0 0.0
    %1038 = vmatpush1.msra.mxu0 0.0
    %1039 = vmatprep.subr.mxu0 0.0
    %1040 = vmatpush1.msra.mxu0 0.0
    %1041 = vmatprep.mubr.f32.mxu0 0.0
    %v1042 = vand.u32 %v828, 4294901760
    %1043 = vmatmul.mubr.f32.gmra.mrb[0].mxu0 %v1042
    %v1044 = vpop.f32.mrb[0].mxu0
    %v1045 = vadd.f32 %v919, %v1044
    %v1046 = vpop.f32.mrb[0].mxu0
    %1047 = vmatprep.mubr.f32.mxu0 0.0
    %v1048 = vand.u32 %v831, 4294901760
    %1049 = vmatmul.mubr.f32.gmra.mrb[0].mxu0 %v1048
    %v1050 = vpop.f32.mrb[0].mxu0
    %v1051 = vadd.f32 %v929, %v1050
    %v1052 = vpop.f32.mrb[0].mxu0
    %1053 = vmatprep.mubr.f32.mxu0 0.0
    %v1054 = vand.u32 %v834, 4294901760
    %1055 = vmatmul.mubr.f32.gmra.mrb[0].mxu0 %v1054
    %v1056 = vpop.f32.mrb[0].mxu0
    %v1057 = vadd.f32 %v939, %v1056
    %v1058 = vpop.f32.mrb[0].mxu0
    %1059 = vdwg.mxu0
    %1060 = vmatprep.subr.mxu0 0.0
    %v1061 = vand.u32 %v801, 4294901760
    %v1062 = vsub.f32 %v801, %v1061
    %1063 = vmatpush1.msra.mxu0 %v1062
    %1064 = vmatprep.subr.mxu0 0.0
    %v1065 = vand.u32 %v802, 4294901760
    %v1066 = vsub.f32 %v802, %v1065
    %1067 = vmatpush1.msra.mxu0 %v1066
    %1068 = vmatprep.subr.mxu0 0.0
    %v1069 = vand.u32 %v803, 4294901760
    %v1070 = vsub.f32 %v803, %v1069
    %1071 = vmatpush1.msra.mxu0 %v1070
    %1072 = vmatprep.subr.mxu0 0.0
    %v1073 = vand.u32 %v804, 4294901760
    %v1074 = vsub.f32 %v804, %v1073
    %1075 = vmatpush1.msra.mxu0 %v1074
    %1076 = vmatprep.subr.mxu0 0.0
    %v1077 = vand.u32 %v805, 4294901760
    %v1078 = vsub.f32 %v805, %v1077
    %1079 = vmatpush1.msra.mxu0 %v1078
    %1080 = vmatprep.subr.mxu0 0.0
    %v1081 = vand.u32 %v806, 4294901760
    %v1082 = vsub.f32 %v806, %v1081
    %1083 = vmatpush1.msra.mxu0 %v1082
    %1084 = vmatprep.subr.mxu0 0.0
    %v1085 = vand.u32 %v838, 4294901760
    %v1086 = vsub.f32 %v838, %v1085
    %1087 = vmatpush1.msra.mxu0 %v1086
    %1088 = vmatprep.subr.mxu0 0.0
    %1089 = vmatpush1.msra.mxu0 0.0
    %1090 = vmatprep.subr.mxu0 0.0
    %1091 = vmatpush1.msra.mxu0 0.0
    %1092 = vmatprep.subr.mxu0 0.0
    %1093 = vmatpush1.msra.mxu0 0.0
    %1094 = vmatprep.subr.mxu0 0.0
    %1095 = vmatpush1.msra.mxu0 0.0
    %1096 = vmatprep.subr.mxu0 0.0
    %1097 = vmatpush1.msra.mxu0 0.0
    %1098 = vmatprep.subr.mxu0 0.0
    %1099 = vmatpush1.msra.mxu0 0.0
    %1100 = vmatprep.subr.mxu0 0.0
    %1101 = vmatpush1.msra.mxu0 0.0
    %1102 = vmatprep.subr.mxu0 0.0
    %1103 = vmatpush1.msra.mxu0 0.0
    %1104 = vmatprep.subr.mxu0 0.0
    %1105 = vmatpush1.msra.mxu0 0.0
    %1106 = vmatprep.subr.mxu0 0.0
    %1107 = vmatpush1.msra.mxu0 0.0
    %1108 = vmatprep.subr.mxu0 0.0
    %1109 = vmatpush1.msra.mxu0 0.0
    %1110 = vmatprep.subr.mxu0 0.0
    %1111 = vmatpush1.msra.mxu0 0.0
    %1112 = vmatprep.subr.mxu0 0.0
    %1113 = vmatpush1.msra.mxu0 0.0
    %1114 = vmatprep.subr.mxu0 0.0
    %1115 = vmatpush1.msra.mxu0 0.0
    %1116 = vmatprep.subr.mxu0 0.0
    %1117 = vmatpush1.msra.mxu0 0.0
    %1118 = vmatprep.subr.mxu0 0.0
    %1119 = vmatpush1.msra.mxu0 0.0
    %1120 = vmatprep.subr.mxu0 0.0
    %1121 = vmatpush1.msra.mxu0 0.0
    %1122 = vmatprep.subr.mxu0 0.0
    %1123 = vmatpush1.msra.mxu0 0.0
    %1124 = vmatprep.subr.mxu0 0.0
    %1125 = vmatpush1.msra.mxu0 0.0
    %1126 = vmatprep.subr.mxu0 0.0
    %1127 = vmatpush1.msra.mxu0 0.0
    %1128 = vmatprep.subr.mxu0 0.0
    %1129 = vmatpush1.msra.mxu0 0.0
    %1130 = vmatprep.subr.mxu0 0.0
    %1131 = vmatpush1.msra.mxu0 0.0
    %1132 = vmatprep.subr.mxu0 0.0
    %1133 = vmatpush1.msra.mxu0 0.0
    %1134 = vmatprep.subr.mxu0 0.0
    %1135 = vmatpush1.msra.mxu0 0.0
    %1136 = vmatprep.subr.mxu0 0.0
    %1137 = vmatpush1.msra.mxu0 0.0
    %1138 = vmatprep.mubr.f32.mxu0 0.0
    %v1139 = vand.u32 %v828, 4294901760
    %v1140 = vsub.f32 %v828, %v1139
    %1141 = vmatmul.mubr.f32.gmra.mrb[0].mxu0 %v1140
    %v1142 = vpop.f32.mrb[0].mxu0
    %v1143 = vadd.f32 %v1045, %v1142
    %v1144 = vpop.f32.mrb[0].mxu0
    %1145 = vmatprep.mubr.f32.mxu0 0.0
    %v1146 = vand.u32 %v831, 4294901760
    %v1147 = vsub.f32 %v831, %v1146
    %1148 = vmatmul.mubr.f32.gmra.mrb[0].mxu0 %v1147
    %v1149 = vpop.f32.mrb[0].mxu0
    %v1150 = vadd.f32 %v1051, %v1149
    %v1151 = vpop.f32.mrb[0].mxu0
    %1152 = vmatprep.mubr.f32.mxu0 0.0
    %v1153 = vand.u32 %v834, 4294901760
    %v1154 = vsub.f32 %v834, %v1153
    %1155 = vmatmul.mubr.f32.gmra.mrb[0].mxu0 %v1154
    %v1156 = vpop.f32.mrb[0].mxu0
    %v1157 = vadd.f32 %v1057, %v1156
    %v1158 = vpop.f32.mrb[0].mxu0
    %1159 = vdwg.mxu0
    %1160 = vmatprep.subr.mxu0 0.0
    %v1161 = vand.u32 %v801, 4294901760
    %1162 = vmatpush1.msra.mxu0 %v1161
    %1163 = vmatprep.subr.mxu0 0.0
    %v1164 = vand.u32 %v802, 4294901760
    %1165 = vmatpush1.msra.mxu0 %v1164
    %1166 = vmatprep.subr.mxu0 0.0
    %v1167 = vand.u32 %v803, 4294901760
    %1168 = vmatpush1.msra.mxu0 %v1167
    %1169 = vmatprep.subr.mxu0 0.0
    %v1170 = vand.u32 %v804, 4294901760
    %1171 = vmatpush1.msra.mxu0 %v1170
    %1172 = vmatprep.subr.mxu0 0.0
    %v1173 = vand.u32 %v805, 4294901760
    %1174 = vmatpush1.msra.mxu0 %v1173
    %1175 = vmatprep.subr.mxu0 0.0
    %v1176 = vand.u32 %v806, 4294901760
    %1177 = vmatpush1.msra.mxu0 %v1176
    %1178 = vmatprep.subr.mxu0 0.0
    %v1179 = vand.u32 %v838, 4294901760
    %1180 = vmatpush1.msra.mxu0 %v1179
    %1181 = vmatprep.subr.mxu0 0.0
    %1182 = vmatpush1.msra.mxu0 0.0
    %1183 = vmatprep.subr.mxu0 0.0
    %1184 = vmatpush1.msra.mxu0 0.0
    %1185 = vmatprep.subr.mxu0 0.0
    %1186 = vmatpush1.msra.mxu0 0.0
    %1187 = vmatprep.subr.mxu0 0.0
    %1188 = vmatpush1.msra.mxu0 0.0
    %1189 = vmatprep.subr.mxu0 0.0
    %1190 = vmatpush1.msra.mxu0 0.0
    %1191 = vmatprep.subr.mxu0 0.0
    %1192 = vmatpush1.msra.mxu0 0.0
    %1193 = vmatprep.subr.mxu0 0.0
    %1194 = vmatpush1.msra.mxu0 0.0
    %1195 = vmatprep.subr.mxu0 0.0
    %1196 = vmatpush1.msra.mxu0 0.0
    %1197 = vmatprep.subr.mxu0 0.0
    %1198 = vmatpush1.msra.mxu0 0.0
    %1199 = vmatprep.subr.mxu0 0.0
    %1200 = vmatpush1.msra.mxu0 0.0
    %1201 = vmatprep.subr.mxu0 0.0
    %1202 = vmatpush1.msra.mxu0 0.0
    %1203 = vmatprep.subr.mxu0 0.0
    %1204 = vmatpush1.msra.mxu0 0.0
    %1205 = vmatprep.subr.mxu0 0.0
    %1206 = vmatpush1.msra.mxu0 0.0
    %1207 = vmatprep.subr.mxu0 0.0
    %1208 = vmatpush1.msra.mxu0 0.0
    %1209 = vmatprep.subr.mxu0 0.0
    %1210 = vmatpush1.msra.mxu0 0.0
    %1211 = vmatprep.subr.mxu0 0.0
    %1212 = vmatpush1.msra.mxu0 0.0
    %1213 = vmatprep.subr.mxu0 0.0
    %1214 = vmatpush1.msra.mxu0 0.0
    %1215 = vmatprep.subr.mxu0 0.0
    %1216 = vmatpush1.msra.mxu0 0.0
    %1217 = vmatprep.subr.mxu0 0.0
    %1218 = vmatpush1.msra.mxu0 0.0
    %1219 = vmatprep.subr.mxu0 0.0
    %1220 = vmatpush1.msra.mxu0 0.0
    %1221 = vmatprep.subr.mxu0 0.0
    %1222 = vmatpush1.msra.mxu0 0.0
    %1223 = vmatprep.subr.mxu0 0.0
    %1224 = vmatpush1.msra.mxu0 0.0
    %1225 = vmatprep.subr.mxu0 0.0
    %1226 = vmatpush1.msra.mxu0 0.0
    %1227 = vmatprep.subr.mxu0 0.0
    %1228 = vmatpush1.msra.mxu0 0.0
    %1229 = vmatprep.subr.mxu0 0.0
    %1230 = vmatpush1.msra.mxu0 0.0
    %1231 = vmatprep.mubr.f32.mxu0 0.0
    %v1232 = vand.u32 %v828, 4294901760
    %v1233 = vsub.f32 %v828, %v1232
    %v1234 = vand.u32 %v1233, 4294901760
    %1235 = vmatmul.mubr.f32.gmra.mrb[0].mxu0 %v1234
    %v1236 = vpop.f32.mrb[0].mxu0
    %v1237 = vadd.f32 %v1143, %v1236
    %v1238 = vpop.f32.mrb[0].mxu0
    %1239 = vmatprep.mubr.f32.mxu0 0.0
    %v1240 = vand.u32 %v831, 4294901760
    %v1241 = vsub.f32 %v831, %v1240
    %v1242 = vand.u32 %v1241, 4294901760
    %1243 = vmatmul.mubr.f32.gmra.mrb[0].mxu0 %v1242
    %v1244 = vpop.f32.mrb[0].mxu0
    %v1245 = vadd.f32 %v1150, %v1244
    %v1246 = vpop.f32.mrb[0].mxu0
    %1247 = vmatprep.mubr.f32.mxu0 0.0
    %v1248 = vand.u32 %v834, 4294901760
    %v1249 = vsub.f32 %v834, %v1248
    %v1250 = vand.u32 %v1249, 4294901760
    %1251 = vmatmul.mubr.f32.gmra.mrb[0].mxu0 %v1250
    %v1252 = vpop.f32.mrb[0].mxu0
    %v1253 = vadd.f32 %v1157, %v1252
    %v1254 = vpop.f32.mrb[0].mxu0
    %1255 = vdwg.mxu0
    %1256 = vmatprep.subr.mxu0 0.0
    %v1257 = vand.u32 %v801, 4294901760
    %v1258 = vsub.f32 %v801, %v1257
    %v1259 = vand.u32 %v1258, 4294901760
    %1260 = vmatpush1.msra.mxu0 %v1259
    %1261 = vmatprep.subr.mxu0 0.0
    %v1262 = vand.u32 %v802, 4294901760
    %v1263 = vsub.f32 %v802, %v1262
    %v1264 = vand.u32 %v1263, 4294901760
    %1265 = vmatpush1.msra.mxu0 %v1264
    %1266 = vmatprep.subr.mxu0 0.0
    %v1267 = vand.u32 %v803, 4294901760
    %v1268 = vsub.f32 %v803, %v1267
    %v1269 = vand.u32 %v1268, 4294901760
    %1270 = vmatpush1.msra.mxu0 %v1269
    %1271 = vmatprep.subr.mxu0 0.0
    %v1272 = vand.u32 %v804, 4294901760
    %v1273 = vsub.f32 %v804, %v1272
    %v1274 = vand.u32 %v1273, 4294901760
    %1275 = vmatpush1.msra.mxu0 %v1274
    %1276 = vmatprep.subr.mxu0 0.0
    %v1277 = vand.u32 %v805, 4294901760
    %v1278 = vsub.f32 %v805, %v1277
    %v1279 = vand.u32 %v1278, 4294901760
    %1280 = vmatpush1.msra.mxu0 %v1279
    %1281 = vmatprep.subr.mxu0 0.0
    %v1282 = vand.u32 %v806, 4294901760
    %v1283 = vsub.f32 %v806, %v1282
    %v1284 = vand.u32 %v1283, 4294901760
    %1285 = vmatpush1.msra.mxu0 %v1284
    %1286 = vmatprep.subr.mxu0 0.0
    %v1287 = vand.u32 %v838, 4294901760
    %v1288 = vsub.f32 %v838, %v1287
    %v1289 = vand.u32 %v1288, 4294901760
    %1290 = vmatpush1.msra.mxu0 %v1289
    %1291 = vmatprep.subr.mxu0 0.0
    %1292 = vmatpush1.msra.mxu0 0.0
    %1293 = vmatprep.subr.mxu0 0.0
    %1294 = vmatpush1.msra.mxu0 0.0
    %1295 = vmatprep.subr.mxu0 0.0
    %1296 = vmatpush1.msra.mxu0 0.0
    %1297 = vmatprep.subr.mxu0 0.0
    %1298 = vmatpush1.msra.mxu0 0.0
    %1299 = vmatprep.subr.mxu0 0.0
    %1300 = vmatpush1.msra.mxu0 0.0
    %1301 = vmatprep.subr.mxu0 0.0
    %1302 = vmatpush1.msra.mxu0 0.0
    %1303 = vmatprep.subr.mxu0 0.0
    %1304 = vmatpush1.msra.mxu0 0.0
    %1305 = vmatprep.subr.mxu0 0.0
    %1306 = vmatpush1.msra.mxu0 0.0
    %1307 = vmatprep.subr.mxu0 0.0
    %1308 = vmatpush1.msra.mxu0 0.0
    %1309 = vmatprep.subr.mxu0 0.0
    %1310 = vmatpush1.msra.mxu0 0.0
    %1311 = vmatprep.subr.mxu0 0.0
    %1312 = vmatpush1.msra.mxu0 0.0
    %1313 = vmatprep.subr.mxu0 0.0
    %1314 = vmatpush1.msra.mxu0 0.0
    %1315 = vmatprep.subr.mxu0 0.0
    %1316 = vmatpush1.msra.mxu0 0.0
    %1317 = vmatprep.subr.mxu0 0.0
    %1318 = vmatpush1.msra.mxu0 0.0
    %1319 = vmatprep.subr.mxu0 0.0
    %1320 = vmatpush1.msra.mxu0 0.0
    %1321 = vmatprep.subr.mxu0 0.0
    %1322 = vmatpush1.msra.mxu0 0.0
    %1323 = vmatprep.subr.mxu0 0.0
    %1324 = vmatpush1.msra.mxu0 0.0
    %1325 = vmatprep.subr.mxu0 0.0
    %1326 = vmatpush1.msra.mxu0 0.0
    %1327 = vmatprep.subr.mxu0 0.0
    %1328 = vmatpush1.msra.mxu0 0.0
    %1329 = vmatprep.subr.mxu0 0.0
    %1330 = vmatpush1.msra.mxu0 0.0
    %1331 = vmatprep.subr.mxu0 0.0
    %1332 = vmatpush1.msra.mxu0 0.0
    %1333 = vmatprep.subr.mxu0 0.0
    %1334 = vmatpush1.msra.mxu0 0.0
    %1335 = vmatprep.subr.mxu0 0.0
    %1336 = vmatpush1.msra.mxu0 0.0
    %1337 = vmatprep.subr.mxu0 0.0
    %1338 = vmatpush1.msra.mxu0 0.0
    %1339 = vmatprep.subr.mxu0 0.0
    %1340 = vmatpush1.msra.mxu0 0.0
    %1341 = vmatprep.mubr.f32.mxu0 0.0
    %v1342 = vand.u32 %v828, 4294901760
    %1343 = vmatmul.mubr.f32.gmra.mrb[0].mxu0 %v1342
    %v1344 = vpop.f32.mrb[0].mxu0
    %v1345 = vadd.f32 %v1237, %v1344
    %v1346 = vpop.f32.mrb[0].mxu0
    %1347 = vmatprep.mubr.f32.mxu0 0.0
    %v1348 = vand.u32 %v831, 4294901760
    %1349 = vmatmul.mubr.f32.gmra.mrb[0].mxu0 %v1348
    %v1350 = vpop.f32.mrb[0].mxu0
    %v1351 = vadd.f32 %v1245, %v1350
    %v1352 = vpop.f32.mrb[0].mxu0
    %1353 = vmatprep.mubr.f32.mxu0 0.0
    %v1354 = vand.u32 %v834, 4294901760
    %1355 = vmatmul.mubr.f32.gmra.mrb[0].mxu0 %v1354
    %v1356 = vpop.f32.mrb[0].mxu0
    %v1357 = vadd.f32 %v1253, %v1356
    %v1358 = vpop.f32.mrb[0].mxu0
    %1359 = vdwg.mxu0
    %1360 = vmatprep.subr.mxu0 0.0
    %v1361 = vand.u32 %v801, 4294901760
    %1362 = vmatpush1.msra.mxu0 %v1361
    %1363 = vmatprep.subr.mxu0 0.0
    %v1364 = vand.u32 %v802, 4294901760
    %1365 = vmatpush1.msra.mxu0 %v1364
    %1366 = vmatprep.subr.mxu0 0.0
    %v1367 = vand.u32 %v803, 4294901760
    %1368 = vmatpush1.msra.mxu0 %v1367
    %1369 = vmatprep.subr.mxu0 0.0
    %v1370 = vand.u32 %v804, 4294901760
    %1371 = vmatpush1.msra.mxu0 %v1370
    %1372 = vmatprep.subr.mxu0 0.0
    %v1373 = vand.u32 %v805, 4294901760
    %1374 = vmatpush1.msra.mxu0 %v1373
    %1375 = vmatprep.subr.mxu0 0.0
    %v1376 = vand.u32 %v806, 4294901760
    %1377 = vmatpush1.msra.mxu0 %v1376
    %1378 = vmatprep.subr.mxu0 0.0
    %v1379 = vand.u32 %v838, 4294901760
    %1380 = vmatpush1.msra.mxu0 %v1379
    %1381 = vmatprep.subr.mxu0 0.0
    %1382 = vmatpush1.msra.mxu0 0.0
    %1383 = vmatprep.subr.mxu0 0.0
    %1384 = vmatpush1.msra.mxu0 0.0
    %1385 = vmatprep.subr.mxu0 0.0
    %1386 = vmatpush1.msra.mxu0 0.0
    %1387 = vmatprep.subr.mxu0 0.0
    %1388 = vmatpush1.msra.mxu0 0.0
    %1389 = vmatprep.subr.mxu0 0.0
    %1390 = vmatpush1.msra.mxu0 0.0
    %1391 = vmatprep.subr.mxu0 0.0
    %1392 = vmatpush1.msra.mxu0 0.0
    %1393 = vmatprep.subr.mxu0 0.0
    %1394 = vmatpush1.msra.mxu0 0.0
    %1395 = vmatprep.subr.mxu0 0.0
    %1396 = vmatpush1.msra.mxu0 0.0
    %1397 = vmatprep.subr.mxu0 0.0
    %1398 = vmatpush1.msra.mxu0 0.0
    %1399 = vmatprep.subr.mxu0 0.0
    %1400 = vmatpush1.msra.mxu0 0.0
    %1401 = vmatprep.subr.mxu0 0.0
    %1402 = vmatpush1.msra.mxu0 0.0
    %1403 = vmatprep.subr.mxu0 0.0
    %1404 = vmatpush1.msra.mxu0 0.0
    %1405 = vmatprep.subr.mxu0 0.0
    %1406 = vmatpush1.msra.mxu0 0.0
    %1407 = vmatprep.subr.mxu0 0.0
    %1408 = vmatpush1.msra.mxu0 0.0
    %1409 = vmatprep.subr.mxu0 0.0
    %1410 = vmatpush1.msra.mxu0 0.0
    %1411 = vmatprep.subr.mxu0 0.0
    %1412 = vmatpush1.msra.mxu0 0.0
    %1413 = vmatprep.subr.mxu0 0.0
    %1414 = vmatpush1.msra.mxu0 0.0
    %1415 = vmatprep.subr.mxu0 0.0
    %1416 = vmatpush1.msra.mxu0 0.0
    %1417 = vmatprep.subr.mxu0 0.0
    %1418 = vmatpush1.msra.mxu0 0.0
    %1419 = vmatprep.subr.mxu0 0.0
    %1420 = vmatpush1.msra.mxu0 0.0
    %1421 = vmatprep.subr.mxu0 0.0
    %1422 = vmatpush1.msra.mxu0 0.0
    %1423 = vmatprep.subr.mxu0 0.0
    %1424 = vmatpush1.msra.mxu0 0.0
    %1425 = vmatprep.subr.mxu0 0.0
    %1426 = vmatpush1.msra.mxu0 0.0
    %1427 = vmatprep.subr.mxu0 0.0
    %1428 = vmatpush1.msra.mxu0 0.0
    %1429 = vmatprep.subr.mxu0 0.0
    %1430 = vmatpush1.msra.mxu0 0.0
    %1431 = vmatprep.mubr.f32.mxu0 0.0
    %v1432 = vand.u32 %v828, 4294901760
    %1433 = vmatmul.mubr.f32.gmra.mrb[0].mxu0 %v1432
    %v1434 = vpop.f32.mrb[0].mxu0
    %v1435 = vadd.f32 %v1345, %v1434
    %v1436 = vpop.f32.mrb[0].mxu0
    %1437 = vmatprep.mubr.f32.mxu0 0.0
    %v1438 = vand.u32 %v831, 4294901760
    %1439 = vmatmul.mubr.f32.gmra.mrb[0].mxu0 %v1438
    %v1440 = vpop.f32.mrb[0].mxu0
    %v1441 = vadd.f32 %v1351, %v1440
    %v1442 = vpop.f32.mrb[0].mxu0
    %1443 = vmatprep.mubr.f32.mxu0 0.0
    %v1444 = vand.u32 %v834, 4294901760
    %1445 = vmatmul.mubr.f32.gmra.mrb[0].mxu0 %v1444
    %v1446 = vpop.f32.mrb[0].mxu0
    %v1447 = vadd.f32 %v1357, %v1446
    %v1448 = vpop.f32.mrb[0].mxu0
    %1449 = vdwg.mxu0
    %v1450 = vmax.f32 %v1435, 0.0
    %v1451 = vmax.f32 %v1441, 0.0
    %v1452 = vmax.f32 %v1447, 0.0
    %v1453 = vld [vmem:[%s3] sm:$0x1]
    %1455 = vset.pattern.permute.xlu0 0
    %1456 = vperm.xlu0 %1455, %v32
    %v1457 = vpop.permute.xlu0 %1456
    %vm1459 = vcmask 162816
    %v1461 = vsel %vm1459, %v1453, 0
    %vm1463 = vcmask 1043456
    %v1465 = vsel %vm1463, %v1452, 0
    %1467 = vmatprep.subr.mxu0 0.0
    %v1468 = vand.u32 %v1450, 4294901760
    %1469 = vmatpush1.msra.mxu0 %v1468
    %1470 = vmatprep.subr.mxu0 0.0
    %v1471 = vand.u32 %v1451, 4294901760
    %1472 = vmatpush1.msra.mxu0 %v1471
    %1473 = vmatprep.subr.mxu0 0.0
    %v1474 = vand.u32 %v1465, 4294901760
    %1475 = vmatpush1.msra.mxu0 %v1474
    %1476 = vmatprep.subr.mxu0 0.0
    %1477 = vmatpush1.msra.mxu0 0.0
    %1478 = vmatprep.subr.mxu0 0.0
    %1479 = vmatpush1.msra.mxu0 0.0
    %1480 = vmatprep.subr.mxu0 0.0
    %1481 = vmatpush1.msra.mxu0 0.0
    %1482 = vmatprep.subr.mxu0 0.0
    %1483 = vmatpush1.msra.mxu0 0.0
    %1484 = vmatprep.subr.mxu0 0.0
    %1485 = vmatpush1.msra.mxu0 0.0
    %1486 = vmatprep.subr.mxu0 0.0
    %1487 = vmatpush1.msra.mxu0 0.0
    %1488 = vmatprep.subr.mxu0 0.0
    %1489 = vmatpush1.msra.mxu0 0.0
    %1490 = vmatprep.subr.mxu0 0.0
    %1491 = vmatpush1.msra.mxu0 0.0
    %1492 = vmatprep.subr.mxu0 0.0
    %1493 = vmatpush1.msra.mxu0 0.0
    %1494 = vmatprep.subr.mxu0 0.0
    %1495 = vmatpush1.msra.mxu0 0.0
    %1496 = vmatprep.subr.mxu0 0.0
    %1497 = vmatpush1.msra.mxu0 0.0
    %1498 = vmatprep.subr.mxu0 0.0
    %1499 = vmatpush1.msra.mxu0 0.0
    %1500 = vmatprep.subr.mxu0 0.0
    %1501 = vmatpush1.msra.mxu0 0.0
    %1502 = vmatprep.subr.mxu0 0.0
    %1503 = vmatpush1.msra.mxu0 0.0
    %1504 = vmatprep.subr.mxu0 0.0
    %1505 = vmatpush1.msra.mxu0 0.0
    %1506 = vmatprep.subr.mxu0 0.0
    %1507 = vmatpush1.msra.mxu0 0.0
    %1508 = vmatprep.subr.mxu0 0.0
    %1509 = vmatpush1.msra.mxu0 0.0
    %1510 = vmatprep.subr.mxu0 0.0
    %1511 = vmatpush1.msra.mxu0 0.0
    %1512 = vmatprep.subr.mxu0 0.0
    %1513 = vmatpush1.msra.mxu0 0.0
    %1514 = vmatprep.subr.mxu0 0.0
    %1515 = vmatpush1.msra.mxu0 0.0
    %1516 = vmatprep.subr.mxu0 0.0
    %1517 = vmatpush1.msra.mxu0 0.0
    %1518 = vmatprep.subr.mxu0 0.0
    %1519 = vmatpush1.msra.mxu0 0.0
    %1520 = vmatprep.subr.mxu0 0.0
    %1521 = vmatpush1.msra.mxu0 0.0
    %1522 = vmatprep.subr.mxu0 0.0
    %1523 = vmatpush1.msra.mxu0 0.0
    %1524 = vmatprep.subr.mxu0 0.0
    %1525 = vmatpush1.msra.mxu0 0.0
    %1526 = vmatprep.subr.mxu0 0.0
    %1527 = vmatpush1.msra.mxu0 0.0
    %1528 = vmatprep.subr.mxu0 0.0
    %1529 = vmatpush1.msra.mxu0 0.0
    %1530 = vmatprep.subr.mxu0 0.0
    %1531 = vmatpush1.msra.mxu0 0.0
    %1532 = vmatprep.subr.mxu0 0.0
    %1533 = vmatpush1.msra.mxu0 0.0
    %1534 = vmatprep.mubr.f32.mxu0 0.0
    %v1535 = vand.u32 %v1461, 4294901760
    %v1536 = vsub.f32 %v1461, %v1535
    %v1537 = vand.u32 %v1536, 4294901760
    %v1538 = vsub.f32 %v1536, %v1537
    %v1539 = vand.u32 %v1538, 4294901760
    %1540 = vmatmul.mubr.f32.gmra.mrb[0].mxu0 %v1539
    %v1541 = vpop.f32.mrb[0].mxu0
    %v1542 = vadd.f32 %v1457, %v1541
    %v1543 = vpop.f32.mrb[0].mxu0
    %1544 = vdwg.mxu0
    %1545 = vmatprep.subr.mxu0 0.0
    %v1546 = vand.u32 %v1450, 4294901760
    %v1547 = vsub.f32 %v1450, %v1546
    %v1548 = vand.u32 %v1547, 4294901760
    %v1549 = vsub.f32 %v1547, %v1548
    %v1550 = vand.u32 %v1549, 4294901760
    %1551 = vmatpush1.msra.mxu0 %v1550
    %1552 = vmatprep.subr.mxu0 0.0
    %v1553 = vand.u32 %v1451, 4294901760
    %v1554 = vsub.f32 %v1451, %v1553
    %v1555 = vand.u32 %v1554, 4294901760
    %v1556 = vsub.f32 %v1554, %v1555
    %v1557 = vand.u32 %v1556, 4294901760
    %1558 = vmatpush1.msra.mxu0 %v1557
    %1559 = vmatprep.subr.mxu0 0.0
    %v1560 = vand.u32 %v1465, 4294901760
    %v1561 = vsub.f32 %v1465, %v1560
    %v1562 = vand.u32 %v1561, 4294901760
    %v1563 = vsub.f32 %v1561, %v1562
    %v1564 = vand.u32 %v1563, 4294901760
    %1565 = vmatpush1.msra.mxu0 %v1564
    %1566 = vmatprep.subr.mxu0 0.0
    %1567 = vmatpush1.msra.mxu0 0.0
    %1568 = vmatprep.subr.mxu0 0.0
    %1569 = vmatpush1.msra.mxu0 0.0
    %1570 = vmatprep.subr.mxu0 0.0
    %1571 = vmatpush1.msra.mxu0 0.0
    %1572 = vmatprep.subr.mxu0 0.0
    %1573 = vmatpush1.msra.mxu0 0.0
    %1574 = vmatprep.subr.mxu0 0.0
    %1575 = vmatpush1.msra.mxu0 0.0
    %1576 = vmatprep.subr.mxu0 0.0
    %1577 = vmatpush1.msra.mxu0 0.0
    %1578 = vmatprep.subr.mxu0 0.0
    %1579 = vmatpush1.msra.mxu0 0.0
    %1580 = vmatprep.subr.mxu0 0.0
    %1581 = vmatpush1.msra.mxu0 0.0
    %1582 = vmatprep.subr.mxu0 0.0
    %1583 = vmatpush1.msra.mxu0 0.0
    %1584 = vmatprep.subr.mxu0 0.0
    %1585 = vmatpush1.msra.mxu0 0.0
    %1586 = vmatprep.subr.mxu0 0.0
    %1587 = vmatpush1.msra.mxu0 0.0
    %1588 = vmatprep.subr.mxu0 0.0
    %1589 = vmatpush1.msra.mxu0 0.0
    %1590 = vmatprep.subr.mxu0 0.0
    %1591 = vmatpush1.msra.mxu0 0.0
    %1592 = vmatprep.subr.mxu0 0.0
    %1593 = vmatpush1.msra.mxu0 0.0
    %1594 = vmatprep.subr.mxu0 0.0
    %1595 = vmatpush1.msra.mxu0 0.0
    %1596 = vmatprep.subr.mxu0 0.0
    %1597 = vmatpush1.msra.mxu0 0.0
    %1598 = vmatprep.subr.mxu0 0.0
    %1599 = vmatpush1.msra.mxu0 0.0
    %1600 = vmatprep.subr.mxu0 0.0
    %1601 = vmatpush1.msra.mxu0 0.0
    %1602 = vmatprep.subr.mxu0 0.0
    %1603 = vmatpush1.msra.mxu0 0.0
    %1604 = vmatprep.subr.mxu0 0.0
    %1605 = vmatpush1.msra.mxu0 0.0
    %1606 = vmatprep.subr.mxu0 0.0
    %1607 = vmatpush1.msra.mxu0 0.0
    %1608 = vmatprep.subr.mxu0 0.0
    %1609 = vmatpush1.msra.mxu0 0.0
    %1610 = vmatprep.subr.mxu0 0.0
    %1611 = vmatpush1.msra.mxu0 0.0
    %1612 = vmatprep.subr.mxu0 0.0
    %1613 = vmatpush1.msra.mxu0 0.0
    %1614 = vmatprep.subr.mxu0 0.0
    %1615 = vmatpush1.msra.mxu0 0.0
    %1616 = vmatprep.subr.mxu0 0.0
    %1617 = vmatpush1.msra.mxu0 0.0
    %1618 = vmatprep.subr.mxu0 0.0
    %1619 = vmatpush1.msra.mxu0 0.0
    %1620 = vmatprep.subr.mxu0 0.0
    %1621 = vmatpush1.msra.mxu0 0.0
    %1622 = vmatprep.subr.mxu0 0.0
    %1623 = vmatpush1.msra.mxu0 0.0
    %1624 = vmatprep.mubr.f32.mxu0 0.0
    %v1625 = vand.u32 %v1461, 4294901760
    %1626 = vmatmul.mubr.f32.gmra.mrb[0].mxu0 %v1625
    %v1627 = vpop.f32.mrb[0].mxu0
    %v1628 = vadd.f32 %v1542, %v1627
    %v1629 = vpop.f32.mrb[0].mxu0
    %1630 = vdwg.mxu0
    %1631 = vmatprep.subr.mxu0 0.0
    %v1632 = vand.u32 %v1450, 4294901760
    %v1633 = vsub.f32 %v1450, %v1632
    %1634 = vmatpush1.msra.mxu0 %v1633
    %1635 = vmatprep.subr.mxu0 0.0
    %v1636 = vand.u32 %v1451, 4294901760
    %v1637 = vsub.f32 %v1451, %v1636
    %1638 = vmatpush1.msra.mxu0 %v1637
    %1639 = vmatprep.subr.mxu0 0.0
    %v1640 = vand.u32 %v1465, 4294901760
    %v1641 = vsub.f32 %v1465, %v1640
    %1642 = vmatpush1.msra.mxu0 %v1641
    %1643 = vmatprep.subr.mxu0 0.0
    %1644 = vmatpush1.msra.mxu0 0.0
    %1645 = vmatprep.subr.mxu0 0.0
    %1646 = vmatpush1.msra.mxu0 0.0
    %1647 = vmatprep.subr.mxu0 0.0
    %1648 = vmatpush1.msra.mxu0 0.0
    %1649 = vmatprep.subr.mxu0 0.0
    %1650 = vmatpush1.msra.mxu0 0.0
    %1651 = vmatprep.subr.mxu0 0.0
    %1652 = vmatpush1.msra.mxu0 0.0
    %1653 = vmatprep.subr.mxu0 0.0
    %1654 = vmatpush1.msra.mxu0 0.0
    %1655 = vmatprep.subr.mxu0 0.0
    %1656 = vmatpush1.msra.mxu0 0.0
    %1657 = vmatprep.subr.mxu0 0.0
    %1658 = vmatpush1.msra.mxu0 0.0
    %1659 = vmatprep.subr.mxu0 0.0
    %1660 = vmatpush1.msra.mxu0 0.0
    %1661 = vmatprep.subr.mxu0 0.0
    %1662 = vmatpush1.msra.mxu0 0.0
    %1663 = vmatprep.subr.mxu0 0.0
    %1664 = vmatpush1.msra.mxu0 0.0
    %1665 = vmatprep.subr.mxu0 0.0
    %1666 = vmatpush1.msra.mxu0 0.0
    %1667 = vmatprep.subr.mxu0 0.0
    %1668 = vmatpush1.msra.mxu0 0.0
    %1669 = vmatprep.subr.mxu0 0.0
    %1670 = vmatpush1.msra.mxu0 0.0
    %1671 = vmatprep.subr.mxu0 0.0
    %1672 = vmatpush1.msra.mxu0 0.0
    %1673 = vmatprep.subr.mxu0 0.0
    %1674 = vmatpush1.msra.mxu0 0.0
    %1675 = vmatprep.subr.mxu0 0.0
    %1676 = vmatpush1.msra.mxu0 0.0
    %1677 = vmatprep.subr.mxu0 0.0
    %1678 = vmatpush1.msra.mxu0 0.0
    %1679 = vmatprep.subr.mxu0 0.0
    %1680 = vmatpush1.msra.mxu0 0.0
    %1681 = vmatprep.subr.mxu0 0.0
    %1682 = vmatpush1.msra.mxu0 0.0
    %1683 = vmatprep.subr.mxu0 0.0
    %1684 = vmatpush1.msra.mxu0 0.0
    %1685 = vmatprep.subr.mxu0 0.0
    %1686 = vmatpush1.msra.mxu0 0.0
    %1687 = vmatprep.subr.mxu0 0.0
    %1688 = vmatpush1.msra.mxu0 0.0
    %1689 = vmatprep.subr.mxu0 0.0
    %1690 = vmatpush1.msra.mxu0 0.0
    %1691 = vmatprep.subr.mxu0 0.0
    %1692 = vmatpush1.msra.mxu0 0.0
    %1693 = vmatprep.subr.mxu0 0.0
    %1694 = vmatpush1.msra.mxu0 0.0
    %1695 = vmatprep.subr.mxu0 0.0
    %1696 = vmatpush1.msra.mxu0 0.0
    %1697 = vmatprep.subr.mxu0 0.0
    %1698 = vmatpush1.msra.mxu0 0.0
    %1699 = vmatprep.subr.mxu0 0.0
    %1700 = vmatpush1.msra.mxu0 0.0
    %1701 = vmatprep.mubr.f32.mxu0 0.0
    %v1702 = vand.u32 %v1461, 4294901760
    %v1703 = vsub.f32 %v1461, %v1702
    %1704 = vmatmul.mubr.f32.gmra.mrb[0].mxu0 %v1703
    %v1705 = vpop.f32.mrb[0].mxu0
    %v1706 = vadd.f32 %v1628, %v1705
    %v1707 = vpop.f32.mrb[0].mxu0
    %1708 = vdwg.mxu0
    %1709 = vmatprep.subr.mxu0 0.0
    %v1710 = vand.u32 %v1450, 4294901760
    %1711 = vmatpush1.msra.mxu0 %v1710
    %1712 = vmatprep.subr.mxu0 0.0
    %v1713 = vand.u32 %v1451, 4294901760
    %1714 = vmatpush1.msra.mxu0 %v1713
    %1715 = vmatprep.subr.mxu0 0.0
    %v1716 = vand.u32 %v1465, 4294901760
    %1717 = vmatpush1.msra.mxu0 %v1716
    %1718 = vmatprep.subr.mxu0 0.0
    %1719 = vmatpush1.msra.mxu0 0.0
    %1720 = vmatprep.subr.mxu0 0.0
    %1721 = vmatpush1.msra.mxu0 0.0
    %1722 = vmatprep.subr.mxu0 0.0
    %1723 = vmatpush1.msra.mxu0 0.0
    %1724 = vmatprep.subr.mxu0 0.0
    %1725 = vmatpush1.msra.mxu0 0.0
    %1726 = vmatprep.subr.mxu0 0.0
    %1727 = vmatpush1.msra.mxu0 0.0
    %1728 = vmatprep.subr.mxu0 0.0
    %1729 = vmatpush1.msra.mxu0 0.0
    %1730 = vmatprep.subr.mxu0 0.0
    %1731 = vmatpush1.msra.mxu0 0.0
    %1732 = vmatprep.subr.mxu0 0.0
    %1733 = vmatpush1.msra.mxu0 0.0
    %1734 = vmatprep.subr.mxu0 0.0
    %1735 = vmatpush1.msra.mxu0 0.0
    %1736 = vmatprep.subr.mxu0 0.0
    %1737 = vmatpush1.msra.mxu0 0.0
    %1738 = vmatprep.subr.mxu0 0.0
    %1739 = vmatpush1.msra.mxu0 0.0
    %1740 = vmatprep.subr.mxu0 0.0
    %1741 = vmatpush1.msra.mxu0 0.0
    %1742 = vmatprep.subr.mxu0 0.0
    %1743 = vmatpush1.msra.mxu0 0.0
    %1744 = vmatprep.subr.mxu0 0.0
    %1745 = vmatpush1.msra.mxu0 0.0
    %1746 = vmatprep.subr.mxu0 0.0
    %1747 = vmatpush1.msra.mxu0 0.0
    %1748 = vmatprep.subr.mxu0 0.0
    %1749 = vmatpush1.msra.mxu0 0.0
    %1750 = vmatprep.subr.mxu0 0.0
    %1751 = vmatpush1.msra.mxu0 0.0
    %1752 = vmatprep.subr.mxu0 0.0
    %1753 = vmatpush1.msra.mxu0 0.0
    %1754 = vmatprep.subr.mxu0 0.0
    %1755 = vmatpush1.msra.mxu0 0.0
    %1756 = vmatprep.subr.mxu0 0.0
    %1757 = vmatpush1.msra.mxu0 0.0
    %1758 = vmatprep.subr.mxu0 0.0
    %1759 = vmatpush1.msra.mxu0 0.0
    %1760 = vmatprep.subr.mxu0 0.0
    %1761 = vmatpush1.msra.mxu0 0.0
    %1762 = vmatprep.subr.mxu0 0.0
    %1763 = vmatpush1.msra.mxu0 0.0
    %1764 = vmatprep.subr.mxu0 0.0
    %1765 = vmatpush1.msra.mxu0 0.0
    %1766 = vmatprep.subr.mxu0 0.0
    %1767 = vmatpush1.msra.mxu0 0.0
    %1768 = vmatprep.subr.mxu0 0.0
    %1769 = vmatpush1.msra.mxu0 0.0
    %1770 = vmatprep.subr.mxu0 0.0
    %1771 = vmatpush1.msra.mxu0 0.0
    %1772 = vmatprep.subr.mxu0 0.0
    %1773 = vmatpush1.msra.mxu0 0.0
    %1774 = vmatprep.subr.mxu0 0.0
    %1775 = vmatpush1.msra.mxu0 0.0
    %1776 = vmatprep.mubr.f32.mxu0 0.0
    %v1777 = vand.u32 %v1461, 4294901760
    %v1778 = vsub.f32 %v1461, %v1777
    %v1779 = vand.u32 %v1778, 4294901760
    %1780 = vmatmul.mubr.f32.gmra.mrb[0].mxu0 %v1779
    %v1781 = vpop.f32.mrb[0].mxu0
    %v1782 = vadd.f32 %v1706, %v1781
    %v1783 = vpop.f32.mrb[0].mxu0
    %1784 = vdwg.mxu0
    %1785 = vmatprep.subr.mxu0 0.0
    %v1786 = vand.u32 %v1450, 4294901760
    %v1787 = vsub.f32 %v1450, %v1786
    %v1788 = vand.u32 %v1787, 4294901760
    %1789 = vmatpush1.msra.mxu0 %v1788
    %1790 = vmatprep.subr.mxu0 0.0
    %v1791 = vand.u32 %v1451, 4294901760
    %v1792 = vsub.f32 %v1451, %v1791
    %v1793 = vand.u32 %v1792, 4294901760
    %1794 = vmatpush1.msra.mxu0 %v1793
    %1795 = vmatprep.subr.mxu0 0.0
    %v1796 = vand.u32 %v1465, 4294901760
    %v1797 = vsub.f32 %v1465, %v1796
    %v1798 = vand.u32 %v1797, 4294901760
    %1799 = vmatpush1.msra.mxu0 %v1798
    %1800 = vmatprep.subr.mxu0 0.0
    %1801 = vmatpush1.msra.mxu0 0.0
    %1802 = vmatprep.subr.mxu0 0.0
    %1803 = vmatpush1.msra.mxu0 0.0
    %1804 = vmatprep.subr.mxu0 0.0
    %1805 = vmatpush1.msra.mxu0 0.0
    %1806 = vmatprep.subr.mxu0 0.0
    %1807 = vmatpush1.msra.mxu0 0.0
    %1808 = vmatprep.subr.mxu0 0.0
    %1809 = vmatpush1.msra.mxu0 0.0
    %1810 = vmatprep.subr.mxu0 0.0
    %1811 = vmatpush1.msra.mxu0 0.0
    %1812 = vmatprep.subr.mxu0 0.0
    %1813 = vmatpush1.msra.mxu0 0.0
    %1814 = vmatprep.subr.mxu0 0.0
    %1815 = vmatpush1.msra.mxu0 0.0
    %1816 = vmatprep.subr.mxu0 0.0
    %1817 = vmatpush1.msra.mxu0 0.0
    %1818 = vmatprep.subr.mxu0 0.0
    %1819 = vmatpush1.msra.mxu0 0.0
    %1820 = vmatprep.subr.mxu0 0.0
    %1821 = vmatpush1.msra.mxu0 0.0
    %1822 = vmatprep.subr.mxu0 0.0
    %1823 = vmatpush1.msra.mxu0 0.0
    %1824 = vmatprep.subr.mxu0 0.0
    %1825 = vmatpush1.msra.mxu0 0.0
    %1826 = vmatprep.subr.mxu0 0.0
    %1827 = vmatpush1.msra.mxu0 0.0
    %1828 = vmatprep.subr.mxu0 0.0
    %1829 = vmatpush1.msra.mxu0 0.0
    %1830 = vmatprep.subr.mxu0 0.0
    %1831 = vmatpush1.msra.mxu0 0.0
    %1832 = vmatprep.subr.mxu0 0.0
    %1833 = vmatpush1.msra.mxu0 0.0
    %1834 = vmatprep.subr.mxu0 0.0
    %1835 = vmatpush1.msra.mxu0 0.0
    %1836 = vmatprep.subr.mxu0 0.0
    %1837 = vmatpush1.msra.mxu0 0.0
    %1838 = vmatprep.subr.mxu0 0.0
    %1839 = vmatpush1.msra.mxu0 0.0
    %1840 = vmatprep.subr.mxu0 0.0
    %1841 = vmatpush1.msra.mxu0 0.0
    %1842 = vmatprep.subr.mxu0 0.0
    %1843 = vmatpush1.msra.mxu0 0.0
    %1844 = vmatprep.subr.mxu0 0.0
    %1845 = vmatpush1.msra.mxu0 0.0
    %1846 = vmatprep.subr.mxu0 0.0
    %1847 = vmatpush1.msra.mxu0 0.0
    %1848 = vmatprep.subr.mxu0 0.0
    %1849 = vmatpush1.msra.mxu0 0.0
    %1850 = vmatprep.subr.mxu0 0.0
    %1851 = vmatpush1.msra.mxu0 0.0
    %1852 = vmatprep.subr.mxu0 0.0
    %1853 = vmatpush1.msra.mxu0 0.0
    %1854 = vmatprep.subr.mxu0 0.0
    %1855 = vmatpush1.msra.mxu0 0.0
    %1856 = vmatprep.subr.mxu0 0.0
    %1857 = vmatpush1.msra.mxu0 0.0
    %1858 = vmatprep.mubr.f32.mxu0 0.0
    %v1859 = vand.u32 %v1461, 4294901760
    %1860 = vmatmul.mubr.f32.gmra.mrb[0].mxu0 %v1859
    %v1861 = vpop.f32.mrb[0].mxu0
    %v1862 = vadd.f32 %v1782, %v1861
    %v1863 = vpop.f32.mrb[0].mxu0
    %1864 = vdwg.mxu0
    %1865 = vmatprep.subr.mxu0 0.0
    %v1866 = vand.u32 %v1450, 4294901760
    %1867 = vmatpush1.msra.mxu0 %v1866
    %1868 = vmatprep.subr.mxu0 0.0
    %v1869 = vand.u32 %v1451, 4294901760
    %1870 = vmatpush1.msra.mxu0 %v1869
    %1871 = vmatprep.subr.mxu0 0.0
    %v1872 = vand.u32 %v1465, 4294901760
    %1873 = vmatpush1.msra.mxu0 %v1872
    %1874 = vmatprep.subr.mxu0 0.0
    %1875 = vmatpush1.msra.mxu0 0.0
    %1876 = vmatprep.subr.mxu0 0.0
    %1877 = vmatpush1.msra.mxu0 0.0
    %1878 = vmatprep.subr.mxu0 0.0
    %1879 = vmatpush1.msra.mxu0 0.0
    %1880 = vmatprep.subr.mxu0 0.0
    %1881 = vmatpush1.msra.mxu0 0.0
    %1882 = vmatprep.subr.mxu0 0.0
    %1883 = vmatpush1.msra.mxu0 0.0
    %1884 = vmatprep.subr.mxu0 0.0
    %1885 = vmatpush1.msra.mxu0 0.0
    %1886 = vmatprep.subr.mxu0 0.0
    %1887 = vmatpush1.msra.mxu0 0.0
    %1888 = vmatprep.subr.mxu0 0.0
    %1889 = vmatpush1.msra.mxu0 0.0
    %1890 = vmatprep.subr.mxu0 0.0
    %1891 = vmatpush1.msra.mxu0 0.0
    %1892 = vmatprep.subr.mxu0 0.0
    %1893 = vmatpush1.msra.mxu0 0.0
    %1894 = vmatprep.subr.mxu0 0.0
    %1895 = vmatpush1.msra.mxu0 0.0
    %1896 = vmatprep.subr.mxu0 0.0
    %1897 = vmatpush1.msra.mxu0 0.0
    %1898 = vmatprep.subr.mxu0 0.0
    %1899 = vmatpush1.msra.mxu0 0.0
    %1900 = vmatprep.subr.mxu0 0.0
    %1901 = vmatpush1.msra.mxu0 0.0
    %1902 = vmatprep.subr.mxu0 0.0
    %1903 = vmatpush1.msra.mxu0 0.0
    %1904 = vmatprep.subr.mxu0 0.0
    %1905 = vmatpush1.msra.mxu0 0.0
    %1906 = vmatprep.subr.mxu0 0.0
    %1907 = vmatpush1.msra.mxu0 0.0
    %1908 = vmatprep.subr.mxu0 0.0
    %1909 = vmatpush1.msra.mxu0 0.0
    %1910 = vmatprep.subr.mxu0 0.0
    %1911 = vmatpush1.msra.mxu0 0.0
    %1912 = vmatprep.subr.mxu0 0.0
    %1913 = vmatpush1.msra.mxu0 0.0
    %1914 = vmatprep.subr.mxu0 0.0
    %1915 = vmatpush1.msra.mxu0 0.0
    %1916 = vmatprep.subr.mxu0 0.0
    %1917 = vmatpush1.msra.mxu0 0.0
    %1918 = vmatprep.subr.mxu0 0.0
    %1919 = vmatpush1.msra.mxu0 0.0
    %1920 = vmatprep.subr.mxu0 0.0
    %1921 = vmatpush1.msra.mxu0 0.0
    %1922 = vmatprep.subr.mxu0 0.0
    %1923 = vmatpush1.msra.mxu0 0.0
    %1924 = vmatprep.subr.mxu0 0.0
    %1925 = vmatpush1.msra.mxu0 0.0
    %1926 = vmatprep.subr.mxu0 0.0
    %1927 = vmatpush1.msra.mxu0 0.0
    %1928 = vmatprep.subr.mxu0 0.0
    %1929 = vmatpush1.msra.mxu0 0.0
    %1930 = vmatprep.subr.mxu0 0.0
    %1931 = vmatpush1.msra.mxu0 0.0
    %1932 = vmatprep.mubr.f32.mxu0 0.0
    %v1933 = vand.u32 %v1461, 4294901760
    %1934 = vmatmul.mubr.f32.gmra.mrb[0].mxu0 %v1933
    %v1935 = vpop.f32.mrb[0].mxu0
    %v1936 = vadd.f32 %v1862, %v1935
    %v1937 = vpop.f32.mrb[0].mxu0
    %1938 = vdwg.mxu0
    %vm1939 = vcmask 24576
    %1940 = vst.msk [vmem:[#allocation2] sm:$0x1] %vm1939, %v1936
    // Predicated region
    $region22: #{tpu_custom_call.1} parent=1 // pred_check
      _
    $region23: #{tpu_custom_call.1} parent=1 // pred_check_branch
      %1942 = sbr.rel (0) target = $region25
    $region24: #{tpu_custom_call.1} parent=1 // pred_region
      %s1944 = ssub.s32 16, 16
      %1945 = vsyncadd [#allocation3], %s1944
      %s1947 = sshll.u32 [#allocation2], 4
      %s1948 = int_to_ptr.vmem [resolvable:$true] %s1947
      %1950 = dma.vmem_to_hbm [thread:$0]  %s1948, 16, %s5, [#allocation3]
    $region25: #{tpu_custom_call.1} parent=1 // pred_fallthru
      _
    // Predicated region
    $region26: #{tpu_custom_call.1} parent=1 // pred_check
      _
    $region27: #{tpu_custom_call.1} parent=1 // pred_check_branch
      %1952 = sbr.rel (0) target = $region29
    $region28: #{tpu_custom_call.1} parent=1 // pred_region
      %1953 = dma.done [#allocation3], 16
    $region29: #{tpu_custom_call.1} parent=1 // pred_fallthru
      _
    %1954 = vsyncpa [#allocation3], 1

</llo_original>
